<compile_context>
chip_gen: v5e
topology: v5e:2x2
jax: 0.10.0
libtpu: 0.0.40
codegen_flags: <defaults>
</compile_context>

<pallas_src>
import functools

import numpy as np
import jax
import jax.numpy as jnp
from jax.experimental import pallas as pl
from jax.experimental.pallas import tpu as pltpu

# ----------------------------- config ---------------------------------------
HIDDEN = 128
NUM_HEADS = 4
NUM_KV_HEADS = 2
HEAD_DIM = HIDDEN // NUM_HEADS          # 32
HALF_DIM = HEAD_DIM // 2                # 16
GQA_REP = NUM_HEADS // NUM_KV_HEADS     # 2
INTERMEDIATE = 128
SEQ = 8
ROPE_THETA = 10000.0
RMS_EPS = 1e-5
LN_EPS = 1e-5
Q_SIZE = NUM_HEADS * HEAD_DIM           # 128
KV_SIZE = NUM_KV_HEADS * HEAD_DIM       # 64
DTYPE = jnp.float32                     # activation dtype (elementwise stays f32)
WEIGHT_DTYPE = jnp.bfloat16             # MXU operand dtype for projection weights
SCALE = HEAD_DIM ** -0.5
NEG_INF = -1e30
# jnp.roll semantics: roll(x, s)[l] = x[(l - s) % N]
ROLL_FWD = Q_SIZE - HALF_DIM            # picks x[l + HALF_DIM]  (shift = -16 mod 128)
ROLL_BWD = HALF_DIM                     # picks x[l - HALF_DIM]


# --------------------------- in-kernel helpers --------------------------------
def _rmsnorm(x, w):
    # vLLM RMSNorm semantics (f32 math).
    var = jnp.mean(x * x, axis=-1, keepdims=True)
    return x * jax.lax.rsqrt(var + RMS_EPS) * w


def _head_ln_rope(x, avg, w, b, cos, sin_lo, sin_hi):
    """ChameleonLayerNorm (per-head LN, affine after bare F.layer_norm) fused
    with neox RoPE on a lane-dense [T, 128] slab.

    Per-head mean/var use the hoisted block-diagonal averaging matrix `avg`
    (MXU).  rotate-half uses two XLU lane rotations; the -/+ sign and the
    first/second-half-of-head gating are folded into the precomputed sin_lo /
    sin_hi tables, so there is no in-kernel mask or permutation matmul."""
    mean = jnp.dot(x, avg, preferred_element_type=jnp.float32)
    xc = x - mean
    var = jnp.dot(xc * xc, avg, preferred_element_type=jnp.float32)
    xn = xc * jax.lax.rsqrt(var + LN_EPS)
    xn = xn * w + b                                    # affine AFTER bare LN
    x_up = pltpu.roll(xn, ROLL_FWD, axis=1)            # xn[:, l + 16]
    x_dn = pltpu.roll(xn, ROLL_BWD, axis=1)            # xn[:, l - 16]
    return xn * cos + x_up * sin_lo + x_dn * sin_hi


def _attention(q, k, v, mask_bias, sum_blk):
    """Causal GQA attention, all heads share one softmax pass.
    q: [T, 128]; k/v: [T, 128] padded slabs (first 64 lanes valid).
    Scores for all heads are packed into one [T, H*T] slab -> single masked
    max/exp/block-sum/reciprocal instead of 4 narrow passes."""
    t = q.shape[0]
    qs = q * SCALE
    s_blocks = []
    for h in range(NUM_HEADS):                         # statically unrolled
        kvh = h // GQA_REP
        qh = qs[:, h * HEAD_DIM:(h + 1) * HEAD_DIM]
        kh = k[:, kvh * HEAD_DIM:(kvh + 1) * HEAD_DIM]
        s_blocks.append(jax.lax.dot_general(
            qh, kh, (((1,), (1,)), ((), ())), preferred_element_type=jnp.float32))
    s = jnp.concatenate(s_blocks, axis=-1) + mask_bias           # [T, H*T]
    m = jnp.max(s, axis=-1, keepdims=True)     # shared row max (softmax-invariant)
    p = jnp.exp(s - m)
    denom = jnp.dot(p, sum_blk, preferred_element_type=jnp.float32)  # per-head sums
    p = p * pl.reciprocal(denom, approx=True)  # EUP slot; tiny deviation vs exact
    outs = []
    for h in range(NUM_HEADS):
        kvh = h // GQA_REP
        outs.append(jnp.dot(p[:, h * t:(h + 1) * t],
                            v[:, kvh * HEAD_DIM:(kvh + 1) * HEAD_DIM],
                            preferred_element_type=jnp.float32))
    return jnp.concatenate(outs, axis=-1)                         # [T, 128]


# ----------------------------- fused kernel -----------------------------------
def _decoder_layer_kernel(*refs, has_residual):
    it = iter(refs)
    x_ref = next(it)
    res_ref = next(it) if has_residual else None
    (in_ln_w_ref, qkv_w_ref, avg_q_ref, avg_k_ref,
     qn_w_ref, qn_b_ref, kn_w_ref, kn_b_ref,
     cos_q_ref, sin_q_lo_ref, sin_q_hi_ref,
     cos_k_ref, sin_k_lo_ref, sin_k_hi_ref,
     mask_ref, sum_blk_ref,
     o_w_ref, post_ln_w_ref, gate_up_w_ref, down_w_ref,
     out_ref, res_out_ref) = tuple(it)

    x = x_ref[...].astype(jnp.float32)
    if has_residual:
        s0 = x + res_ref[...].astype(jnp.float32)
    else:
        s0 = x

    # input_layernorm (RMSNorm, fused with residual add when present)
    h = _rmsnorm(s0, in_ln_w_ref[...])

    # qkv projection -> padded lane-aligned layout [q:128 | k:128 | v:128]
    qkv = jnp.dot(h.astype(WEIGHT_DTYPE), qkv_w_ref[...],
                  preferred_element_type=jnp.float32)
    q = qkv[:, 0:Q_SIZE]
    k = qkv[:, Q_SIZE:2 * Q_SIZE]          # first KV_SIZE lanes valid, rest zero
    v = qkv[:, 2 * Q_SIZE:3 * Q_SIZE]      # first KV_SIZE lanes valid, rest zero

    # per-head LayerNorm + RoPE (lane-dense, hoisted constants, XLU rolls)
    q = _head_ln_rope(q, avg_q_ref[...], qn_w_ref[...], qn_b_ref[...],
                      cos_q_ref[...], sin_q_lo_ref[...], sin_q_hi_ref[...])
    k = _head_ln_rope(k, avg_k_ref[...], kn_w_ref[...], kn_b_ref[...],
                      cos_k_ref[...], sin_k_lo_ref[...], sin_k_hi_ref[...])

    # causal attention + o_proj
    attn = _attention(q, k, v, mask_ref[...], sum_blk_ref[...])          # [T,128]
    attn_o = jnp.dot(attn.astype(WEIGHT_DTYPE), o_w_ref[...],
                     preferred_element_type=jnp.float32)

    # post_attention_layernorm (fused add RMSNorm); residual output = the sum
    s1 = attn_o + s0
    res_out_ref[...] = s1.astype(res_out_ref.dtype)
    h2 = _rmsnorm(s1, post_ln_w_ref[...])

    # MLP: gate_up_proj -> SiluAndMul -> down_proj
    gate_up = jnp.dot(h2.astype(WEIGHT_DTYPE), gate_up_w_ref[...],
                      preferred_element_type=jnp.float32)
    g = gate_up[:, :INTERMEDIATE]
    u = gate_up[:, INTERMEDIATE:]
    act = g * jax.lax.logistic(g) * u
    out_ref[...] = jnp.dot(act.astype(WEIGHT_DTYPE), down_w_ref[...],
                           preferred_element_type=jnp.float32).astype(out_ref.dtype)


# --------------------------- hoisted constants ---------------------------------
def _ln_avg_constants():
    lane = np.arange(Q_SIZE)
    same_head = (lane[:, None] // HEAD_DIM) == (lane[None, :] // HEAD_DIM)
    avg_q = np.where(same_head, 1.0 / HEAD_DIM, 0.0).astype(np.float32)
    avg_k = np.where(same_head & (lane[None, :] < KV_SIZE),
                     1.0 / HEAD_DIM, 0.0).astype(np.float32)
    return jnp.asarray(avg_q), jnp.asarray(avg_k)


def _attn_constants(t):
    col = np.arange(NUM_HEADS * t)
    row = np.arange(t)
    causal = (col[None, :] % t) <= row[:, None]
    mask_bias = np.where(causal, 0.0, NEG_INF).astype(np.float32)        # [T, H*T]
    same_blk = (col[:, None] // t) == (col[None, :] // t)
    sum_blk = same_blk.astype(np.float32)                                # [H*T, H*T]
    return jnp.asarray(mask_bias), jnp.asarray(sum_blk)


def _rope_tables(positions):
    """Lane-dense neox cos/sin tables (hoisted).  The rotate-half sign and the
    first/second-half-of-head gating are folded into sin_lo / sin_hi."""
    t = positions.shape[0]
    inv_freq = 1.0 / (ROPE_THETA ** (
        jnp.arange(0, HEAD_DIM, 2, dtype=jnp.float32) / HEAD_DIM))
    freqs = positions.astype(jnp.float32)[:, None] * inv_freq[None, :]   # [T,16]
    cos = jnp.cos(freqs)
    sin = jnp.sin(freqs)
    zeros = jnp.zeros_like(sin)
    cos_head = jnp.concatenate([cos, cos], axis=-1)                      # [T,32]
    sin_lo_head = jnp.concatenate([-sin, zeros], axis=-1)   # gates x[l+16] partner
    sin_hi_head = jnp.concatenate([zeros, sin], axis=-1)    # gates x[l-16] partner

    def tile_q(head_tbl):
        return jnp.tile(head_tbl, (1, NUM_HEADS))                        # [T,128]

    def tile_k(head_tbl):
        pad = jnp.zeros((t, Q_SIZE - KV_SIZE), jnp.float32)
        return jnp.concatenate([jnp.tile(head_tbl, (1, NUM_KV_HEADS)), pad], -1)

    return (tile_q(cos_head), tile_q(sin_lo_head), tile_q(sin_hi_head),
            tile_k(cos_head), tile_k(sin_lo_head), tile_k(sin_hi_head))


# ------------------------------- wrapper ---------------------------------------
def pack_params(params):
    """Pack weights once: bf16 projection weights, 128-lane-aligned padded qkv
    layout [q:128 | k:64+64pad | v:64+64pad], flattened/padded LN affines."""
    f32 = jnp.float32
    w_qkv = params["w_qkv"].astype(WEIGHT_DTYPE)                 # [128, 256]
    zpad = jnp.zeros((HIDDEN, Q_SIZE - KV_SIZE), WEIGHT_DTYPE)   # [128, 64]
    w_qkv_p = jnp.concatenate(
        [w_qkv[:, :Q_SIZE],
         w_qkv[:, Q_SIZE:Q_SIZE + KV_SIZE], zpad,
         w_qkv[:, Q_SIZE + KV_SIZE:], zpad], axis=1)             # [128, 384]
    kpad = jnp.zeros((Q_SIZE - KV_SIZE,), f32)
    return {
        "in_ln_w": params["input_ln_w"].astype(f32).reshape(1, HIDDEN),
        "post_ln_w": params["post_ln_w"].astype(f32).reshape(1, HIDDEN),
        "w_qkv_p": w_qkv_p,
        "w_o": params["w_o"].astype(WEIGHT_DTYPE),
        "w_gate_up": params["w_gate_up"].astype(WEIGHT_DTYPE),
        "w_down": params["w_down"].astype(WEIGHT_DTYPE),
        "qn_w": params["q_norm_w"].astype(f32).reshape(1, Q_SIZE),
        "qn_b": params["q_norm_b"].astype(f32).reshape(1, Q_SIZE),
        "kn_w": jnp.concatenate(
            [params["k_norm_w"].astype(f32).reshape(-1), kpad]).reshape(1, Q_SIZE),
        "kn_b": jnp.concatenate(
            [params["k_norm_b"].astype(f32).reshape(-1), kpad]).reshape(1, Q_SIZE),
    }


def chameleon_decoder_layer(positions, hidden_states, packed, residual=None):
    t = hidden_states.shape[0]
    has_residual = residual is not None

    avg_q, avg_k = _ln_avg_constants()
    mask_bias, sum_blk = _attn_constants(t)
    cos_q, sin_q_lo, sin_q_hi, cos_k, sin_k_lo, sin_k_hi = _rope_tables(positions)

    in_arrays = [hidden_states]
    if has_residual:
        in_arrays.append(residual)          # residual DMA skipped entirely if None
    in_arrays += [
        packed["in_ln_w"], packed["w_qkv_p"], avg_q, avg_k,
        packed["qn_w"], packed["qn_b"], packed["kn_w"], packed["kn_b"],
        cos_q, sin_q_lo, sin_q_hi, cos_k, sin_k_lo, sin_k_hi,
        mask_bias, sum_blk,
        packed["w_o"], packed["post_ln_w"], packed["w_gate_up"], packed["w_down"],
    ]

    kernel = functools.partial(_decoder_layer_kernel, has_residual=has_residual)
    out, res_out = pl.pallas_call(
        kernel,
        out_shape=(jax.ShapeDtypeStruct((t, HIDDEN), hidden_states.dtype),
                   jax.ShapeDtypeStruct((t, HIDDEN), hidden_states.dtype)),
    )(*in_arrays)
    return out, res_out


# ------------------------------- params ----------------------------------------
def init_params(key):
    ks = jax.random.split(key, 10)
    s = 0.02
    return {
        "input_ln_w": jnp.ones((HIDDEN,), DTYPE)
                      + s * jax.random.normal(ks[0], (HIDDEN,), DTYPE),
        "post_ln_w": jnp.ones((HIDDEN,), DTYPE)
                     + s * jax.random.normal(ks[1], (HIDDEN,), DTYPE),
        # Linear weights stored as [in, out] (== torch weight.T), bias=False.
        "w_qkv": s * jax.random.normal(ks[2], (HIDDEN, Q_SIZE + 2 * KV_SIZE), DTYPE),
        "w_o": s * jax.random.normal(ks[3], (NUM_HEADS * HEAD_DIM, HIDDEN), DTYPE),
        "w_gate_up": s * jax.random.normal(ks[4], (HIDDEN, 2 * INTERMEDIATE), DTYPE),
        "w_down": s * jax.random.normal(ks[5], (INTERMEDIATE, HIDDEN), DTYPE),
        "q_norm_w": jnp.ones((NUM_HEADS, HEAD_DIM), DTYPE)
                    + s * jax.random.normal(ks[6], (NUM_HEADS, HEAD_DIM), DTYPE),
        "q_norm_b": s * jax.random.normal(ks[7], (NUM_HEADS, HEAD_DIM), DTYPE),
        "k_norm_w": jnp.ones((NUM_KV_HEADS, HEAD_DIM), DTYPE)
                    + s * jax.random.normal(ks[8], (NUM_KV_HEADS, HEAD_DIM), DTYPE),
        "k_norm_b": s * jax.random.normal(ks[9], (NUM_KV_HEADS, HEAD_DIM), DTYPE),
    }


# --------------------------- pure-JAX reference ---------------------------------
def ref_decoder_layer(positions, x, params, residual=None):
    """Direct transcription of the PyTorch module (bf16 MXU operands to match
    the kernel's weight quantization, f32 elementwise, exact softmax)."""
    f32, bf16 = jnp.float32, jnp.bfloat16
    t = x.shape[0]
    s0 = x.astype(f32) if residual is None else x.astype(f32) + residual.astype(f32)

    def rmsnorm(v, w):
        return v * jax.lax.rsqrt(jnp.mean(v * v, -1, keepdims=True) + RMS_EPS) * w

    h = rmsnorm(s0, params["input_ln_w"].astype(f32))
    qkv = jnp.dot(h.astype(bf16), params["w_qkv"].astype(bf16),
                  preferred_element_type=f32)
    q, k, v = (qkv[:, :Q_SIZE], qkv[:, Q_SIZE:Q_SIZE + KV_SIZE],
               qkv[:, Q_SIZE + KV_SIZE:])

    def head_ln(xx, w, b, nh):
        xx = xx.reshape(t, nh, HEAD_DIM)
        mu = jnp.mean(xx, -1, keepdims=True)
        var = jnp.mean((xx - mu) ** 2, -1, keepdims=True)
        return (xx - mu) * jax.lax.rsqrt(var + LN_EPS) * w + b

    qh = head_ln(q, params["q_norm_w"], params["q_norm_b"], NUM_HEADS)
    kh = head_ln(k, params["k_norm_w"], params["k_norm_b"], NUM_KV_HEADS)

    inv_freq = 1.0 / (ROPE_THETA ** (
        jnp.arange(0, HEAD_DIM, 2, dtype=f32) / HEAD_DIM))
    fr = positions.astype(f32)[:, None] * inv_freq[None, :]
    cos, sin = jnp.cos(fr)[:, None, :], jnp.sin(fr)[:, None, :]

    def rope(xx):
        x1, x2 = xx[..., :HALF_DIM], xx[..., HALF_DIM:]
        return jnp.concatenate([x1 * cos - x2 * sin, x2 * cos + x1 * sin], -1)

    qh, kh = rope(qh), rope(kh)
    vh = v.reshape(t, NUM_KV_HEADS, HEAD_DIM)
    kh_r = jnp.repeat(kh, GQA_REP, axis=1)
    vh_r = jnp.repeat(vh, GQA_REP, axis=1)
    s = jnp.einsum("thd,shd->hts", qh, kh_r) * SCALE
    causal = jnp.tril(jnp.ones((t, t), bool))
    s = jnp.where(causal[None], s, -jnp.inf)
    p = jax.nn.softmax(s, axis=-1)
    o = jnp.einsum("hts,shd->thd", p, vh_r).reshape(t, -1)
    attn_o = jnp.dot(o.astype(bf16), params["w_o"].astype(bf16),
                     preferred_element_type=f32)
    s1 = attn_o + s0
    h2 = rmsnorm(s1, params["post_ln_w"].astype(f32))
    gu = jnp.dot(h2.astype(bf16), params["w_gate_up"].astype(bf16),
                 preferred_element_type=f32)
    g, u = gu[:, :INTERMEDIATE], gu[:, INTERMEDIATE:]
    act = g * jax.nn.sigmoid(g) * u
    out = jnp.dot(act.astype(bf16), params["w_down"].astype(bf16),
                  preferred_element_type=f32)
    return out.astype(x.dtype), s1.astype(x.dtype)


# --------------------------------- main -----------------------------------------
if __name__ == "__main__":
    key = jax.random.PRNGKey(0)
    k_p, k_x = jax.random.split(key)
    params = init_params(k_p)
    packed = pack_params(params)

    hidden_states = jax.random.normal(k_x, (SEQ, HIDDEN), DTYPE)
    positions = jnp.arange(SEQ, dtype=jnp.int32)

    layer = jax.jit(chameleon_decoder_layer)
    # first layer: residual=None path
    out1, res1 = layer(positions, hidden_states, packed, None)
    # second layer: fused add+RMSNorm path
    out2, res2 = layer(positions, out1, packed, res1)
    jax.block_until_ready((out1, res1, out2, res2))

    assert out1.shape == (SEQ, HIDDEN) and res1.shape == (SEQ, HIDDEN)
    assert out2.shape == (SEQ, HIDDEN) and res2.shape == (SEQ, HIDDEN)
    assert bool(jnp.all(jnp.isfinite(out2))) and bool(jnp.all(jnp.isfinite(res2)))

    # numerics check vs a pure-JAX transcription of the PyTorch module
    r_out1, r_res1 = ref_decoder_layer(positions, hidden_states, params, None)
    r_out2, r_res2 = ref_decoder_layer(positions, r_out1, params, r_res1)

    def max_diff(a, b):
        return float(jnp.max(jnp.abs(a.astype(jnp.float32) - b.astype(jnp.float32))))

    assert max_diff(res1, r_res1) < 5e-3, max_diff(res1, r_res1)
    assert max_diff(out1, r_out1) < 5e-3, max_diff(out1, r_out1)
    assert max_diff(res2, r_res2) < 1e-2, max_diff(res2, r_res2)
    assert max_diff(out2, r_out2) < 1e-2, max_diff(out2, r_out2)
    print("KERNEL_OK")
</pallas_src>

<mosaic_0001>
module attributes {stable_mosaic.version = 11 : i64} {
  func.func @_decoder_layer_kernel(%arg0: memref<8x128xf32, #tpu.memory_space<vmem>>, %arg1: memref<1x128xf32, #tpu.memory_space<vmem>>, %arg2: memref<128x384xbf16, #tpu.memory_space<vmem>>, %arg3: memref<128x128xf32, #tpu.memory_space<vmem>>, %arg4: memref<128x128xf32, #tpu.memory_space<vmem>>, %arg5: memref<1x128xf32, #tpu.memory_space<vmem>>, %arg6: memref<1x128xf32, #tpu.memory_space<vmem>>, %arg7: memref<1x128xf32, #tpu.memory_space<vmem>>, %arg8: memref<1x128xf32, #tpu.memory_space<vmem>>, %arg9: memref<8x128xf32, #tpu.memory_space<vmem>>, %arg10: memref<8x128xf32, #tpu.memory_space<vmem>>, %arg11: memref<8x128xf32, #tpu.memory_space<vmem>>, %arg12: memref<8x128xf32, #tpu.memory_space<vmem>>, %arg13: memref<8x128xf32, #tpu.memory_space<vmem>>, %arg14: memref<8x128xf32, #tpu.memory_space<vmem>>, %arg15: memref<8x32xf32, #tpu.memory_space<vmem>>, %arg16: memref<32x32xf32, #tpu.memory_space<vmem>>, %arg17: memref<128x128xbf16, #tpu.memory_space<vmem>>, %arg18: memref<1x128xf32, #tpu.memory_space<vmem>>, %arg19: memref<128x256xbf16, #tpu.memory_space<vmem>>, %arg20: memref<128x128xbf16, #tpu.memory_space<vmem>>, %arg21: memref<8x128xf32, #tpu.memory_space<vmem>>, %arg22: memref<8x128xf32, #tpu.memory_space<vmem>>) attributes {dimension_semantics = [], scalar_prefetch = 0 : i64, scratch_operands = 0 : i64, tpu.core_type = #tpu.core_type<tc>} {
    %c0 = arith.constant 0 : index
    %c0_0 = arith.constant 0 : index
    %0 = vector.load %arg0[%c0, %c0_0] : memref<8x128xf32, #tpu.memory_space<vmem>>, vector<8x128xf32>
    %c0_1 = arith.constant 0 : index
    %c0_2 = arith.constant 0 : index
    %1 = vector.load %arg1[%c0_1, %c0_2] : memref<1x128xf32, #tpu.memory_space<vmem>>, vector<1x128xf32>
    %2 = arith.mulf %0, %0 : vector<8x128xf32>
    %cst = arith.constant dense<0.000000e+00> : vector<8xf32>
    %3 = vector.multi_reduction <add>, %2, %cst [1] : vector<8x128xf32> to vector<8xf32>
    %4 = vector.shape_cast %3 : vector<8xf32> to vector<8x1xf32>
    %cst_3 = arith.constant 1.280000e+02 : f32
    %5 = vector.broadcast %cst_3 : f32 to vector<8x1xf32>
    %6 = arith.divf %4, %5 : vector<8x1xf32>
    %cst_4 = arith.constant 9.99999974E-6 : f32
    %7 = vector.broadcast %cst_4 : f32 to vector<8x1xf32>
    %8 = arith.addf %6, %7 : vector<8x1xf32>
    %9 = math.rsqrt %8 : vector<8x1xf32>
    %10 = vector.broadcast %9 : vector<8x1xf32> to vector<8x128xf32>
    %11 = arith.mulf %0, %10 : vector<8x128xf32>
    %12 = vector.broadcast %1 : vector<1x128xf32> to vector<8x128xf32>
    %13 = arith.mulf %11, %12 : vector<8x128xf32>
    %14 = arith.truncf %13 : vector<8x128xf32> to vector<8x128xbf16>
    %c0_5 = arith.constant 0 : index
    %c0_6 = arith.constant 0 : index
    %15 = vector.load %arg2[%c0_5, %c0_6] : memref<128x384xbf16, #tpu.memory_space<vmem>>, vector<128x384xbf16>
    %cst_7 = arith.constant dense<0.000000e+00> : vector<8x384xf32>
    %16 = tpu.matmul %14, %15, %cst_7 {dimension_numbers = #tpu.dot_dimension_numbers<[1], [0], [0], [1], [0, 0, 1, 1], [], []>} : vector<8x128xbf16>, vector<128x384xbf16>, vector<8x384xf32> -> vector<8x384xf32>
    %17 = vector.extract_strided_slice %16 {offsets = [0, 0], sizes = [8, 128], strides = [1, 1]} : vector<8x384xf32> to vector<8x128xf32>
    %18 = vector.extract_strided_slice %16 {offsets = [0, 128], sizes = [8, 128], strides = [1, 1]} : vector<8x384xf32> to vector<8x128xf32>
    %19 = vector.extract_strided_slice %16 {offsets = [0, 256], sizes = [8, 128], strides = [1, 1]} : vector<8x384xf32> to vector<8x128xf32>
    %c0_8 = arith.constant 0 : index
    %c0_9 = arith.constant 0 : index
    %20 = vector.load %arg3[%c0_8, %c0_9] : memref<128x128xf32, #tpu.memory_space<vmem>>, vector<128x128xf32>
    %c0_10 = arith.constant 0 : index
    %c0_11 = arith.constant 0 : index
    %21 = vector.load %arg5[%c0_10, %c0_11] : memref<1x128xf32, #tpu.memory_space<vmem>>, vector<1x128xf32>
    %c0_12 = arith.constant 0 : index
    %c0_13 = arith.constant 0 : index
    %22 = vector.load %arg6[%c0_12, %c0_13] : memref<1x128xf32, #tpu.memory_space<vmem>>, vector<1x128xf32>
    %c0_14 = arith.constant 0 : index
    %c0_15 = arith.constant 0 : index
    %23 = vector.load %arg9[%c0_14, %c0_15] : memref<8x128xf32, #tpu.memory_space<vmem>>, vector<8x128xf32>
    %c0_16 = arith.constant 0 : index
    %c0_17 = arith.constant 0 : index
    %24 = vector.load %arg10[%c0_16, %c0_17] : memref<8x128xf32, #tpu.memory_space<vmem>>, vector<8x128xf32>
    %c0_18 = arith.constant 0 : index
    %c0_19 = arith.constant 0 : index
    %25 = vector.load %arg11[%c0_18, %c0_19] : memref<8x128xf32, #tpu.memory_space<vmem>>, vector<8x128xf32>
    %cst_20 = arith.constant dense<0.000000e+00> : vector<8x128xf32>
    %26 = tpu.matmul %17, %20, %cst_20 {dimension_numbers = #tpu.dot_dimension_numbers<[1], [0], [0], [1], [0, 0, 1, 1], [], []>} : vector<8x128xf32>, vector<128x128xf32>, vector<8x128xf32> -> vector<8x128xf32>
    %27 = arith.subf %17, %26 : vector<8x128xf32>
    %28 = arith.mulf %27, %27 : vector<8x128xf32>
    %cst_21 = arith.constant dense<0.000000e+00> : vector<8x128xf32>
    %29 = tpu.matmul %28, %20, %cst_21 {dimension_numbers = #tpu.dot_dimension_numbers<[1], [0], [0], [1], [0, 0, 1, 1], [], []>} : vector<8x128xf32>, vector<128x128xf32>, vector<8x128xf32> -> vector<8x128xf32>
    %cst_22 = arith.constant 9.99999974E-6 : f32
    %30 = vector.broadcast %cst_22 : f32 to vector<8x128xf32>
    %31 = arith.addf %29, %30 : vector<8x128xf32>
    %32 = math.rsqrt %31 : vector<8x128xf32>
    %33 = arith.mulf %27, %32 : vector<8x128xf32>
    %34 = vector.broadcast %21 : vector<1x128xf32> to vector<8x128xf32>
    %35 = arith.mulf %33, %34 : vector<8x128xf32>
    %36 = vector.broadcast %22 : vector<1x128xf32> to vector<8x128xf32>
    %37 = arith.addf %35, %36 : vector<8x128xf32>
    %c112_i32 = arith.constant 112 : i32
    %38 = tpu.dynamic_rotate %37 by %c112_i32 dim 1 : vector<8x128xf32>, i32 -> vector<8x128xf32>
    %c16_i32 = arith.constant 16 : i32
    %39 = tpu.dynamic_rotate %37 by %c16_i32 dim 1 : vector<8x128xf32>, i32 -> vector<8x128xf32>
    %40 = arith.mulf %37, %23 : vector<8x128xf32>
    %41 = arith.mulf %38, %24 : vector<8x128xf32>
    %42 = arith.addf %40, %41 : vector<8x128xf32>
    %43 = arith.mulf %39, %25 : vector<8x128xf32>
    %44 = arith.addf %42, %43 : vector<8x128xf32>
    %c0_23 = arith.constant 0 : index
    %c0_24 = arith.constant 0 : index
    %45 = vector.load %arg4[%c0_23, %c0_24] : memref<128x128xf32, #tpu.memory_space<vmem>>, vector<128x128xf32>
    %c0_25 = arith.constant 0 : index
    %c0_26 = arith.constant 0 : index
    %46 = vector.load %arg7[%c0_25, %c0_26] : memref<1x128xf32, #tpu.memory_space<vmem>>, vector<1x128xf32>
    %c0_27 = arith.constant 0 : index
    %c0_28 = arith.constant 0 : index
    %47 = vector.load %arg8[%c0_27, %c0_28] : memref<1x128xf32, #tpu.memory_space<vmem>>, vector<1x128xf32>
    %c0_29 = arith.constant 0 : index
    %c0_30 = arith.constant 0 : index
    %48 = vector.load %arg12[%c0_29, %c0_30] : memref<8x128xf32, #tpu.memory_space<vmem>>, vector<8x128xf32>
    %c0_31 = arith.constant 0 : index
    %c0_32 = arith.constant 0 : index
    %49 = vector.load %arg13[%c0_31, %c0_32] : memref<8x128xf32, #tpu.memory_space<vmem>>, vector<8x128xf32>
    %c0_33 = arith.constant 0 : index
    %c0_34 = arith.constant 0 : index
    %50 = vector.load %arg14[%c0_33, %c0_34] : memref<8x128xf32, #tpu.memory_space<vmem>>, vector<8x128xf32>
    %cst_35 = arith.constant dense<0.000000e+00> : vector<8x128xf32>
    %51 = tpu.matmul %18, %45, %cst_35 {dimension_numbers = #tpu.dot_dimension_numbers<[1], [0], [0], [1], [0, 0, 1, 1], [], []>} : vector<8x128xf32>, vector<128x128xf32>, vector<8x128xf32> -> vector<8x128xf32>
    %52 = arith.subf %18, %51 : vector<8x128xf32>
    %53 = arith.mulf %52, %52 : vector<8x128xf32>
    %cst_36 = arith.constant dense<0.000000e+00> : vector<8x128xf32>
    %54 = tpu.matmul %53, %45, %cst_36 {dimension_numbers = #tpu.dot_dimension_numbers<[1], [0], [0], [1], [0, 0, 1, 1], [], []>} : vector<8x128xf32>, vector<128x128xf32>, vector<8x128xf32> -> vector<8x128xf32>
    %cst_37 = arith.constant 9.99999974E-6 : f32
    %55 = vector.broadcast %cst_37 : f32 to vector<8x128xf32>
    %56 = arith.addf %54, %55 : vector<8x128xf32>
    %57 = math.rsqrt %56 : vector<8x128xf32>
    %58 = arith.mulf %52, %57 : vector<8x128xf32>
    %59 = vector.broadcast %46 : vector<1x128xf32> to vector<8x128xf32>
    %60 = arith.mulf %58, %59 : vector<8x128xf32>
    %61 = vector.broadcast %47 : vector<1x128xf32> to vector<8x128xf32>
    %62 = arith.addf %60, %61 : vector<8x128xf32>
    %c112_i32_38 = arith.constant 112 : i32
    %63 = tpu.dynamic_rotate %62 by %c112_i32_38 dim 1 : vector<8x128xf32>, i32 -> vector<8x128xf32>
    %c16_i32_39 = arith.constant 16 : i32
    %64 = tpu.dynamic_rotate %62 by %c16_i32_39 dim 1 : vector<8x128xf32>, i32 -> vector<8x128xf32>
    %65 = arith.mulf %62, %48 : vector<8x128xf32>
    %66 = arith.mulf %63, %49 : vector<8x128xf32>
    %67 = arith.addf %65, %66 : vector<8x128xf32>
    %68 = arith.mulf %64, %50 : vector<8x128xf32>
    %69 = arith.addf %67, %68 : vector<8x128xf32>
    %c0_40 = arith.constant 0 : index
    %c0_41 = arith.constant 0 : index
    %70 = vector.load %arg15[%c0_40, %c0_41] : memref<8x32xf32, #tpu.memory_space<vmem>>, vector<8x32xf32>
    %c0_42 = arith.constant 0 : index
    %c0_43 = arith.constant 0 : index
    %71 = vector.load %arg16[%c0_42, %c0_43] : memref<32x32xf32, #tpu.memory_space<vmem>>, vector<32x32xf32>
    %cst_44 = arith.constant 0.176776692 : f32
    %72 = vector.broadcast %cst_44 : f32 to vector<8x128xf32>
    %73 = arith.mulf %44, %72 : vector<8x128xf32>
    %74 = vector.extract_strided_slice %73 {offsets = [0, 0], sizes = [8, 32], strides = [1, 1]} : vector<8x128xf32> to vector<8x32xf32>
    %75 = vector.extract_strided_slice %69 {offsets = [0, 0], sizes = [8, 32], strides = [1, 1]} : vector<8x128xf32> to vector<8x32xf32>
    %cst_45 = arith.constant dense<0.000000e+00> : vector<8x8xf32>
    %76 = tpu.matmul %74, %75, %cst_45 {dimension_numbers = #tpu.dot_dimension_numbers<[1], [1], [0], [0], [0, 0, 1, 0], [], []>} : vector<8x32xf32>, vector<8x32xf32>, vector<8x8xf32> -> vector<8x8xf32>
    %77 = vector.extract_strided_slice %73 {offsets = [0, 32], sizes = [8, 32], strides = [1, 1]} : vector<8x128xf32> to vector<8x32xf32>
    %78 = vector.extract_strided_slice %69 {offsets = [0, 0], sizes = [8, 32], strides = [1, 1]} : vector<8x128xf32> to vector<8x32xf32>
    %cst_46 = arith.constant dense<0.000000e+00> : vector<8x8xf32>
    %79 = tpu.matmul %77, %78, %cst_46 {dimension_numbers = #tpu.dot_dimension_numbers<[1], [1], [0], [0], [0, 0, 1, 0], [], []>} : vector<8x32xf32>, vector<8x32xf32>, vector<8x8xf32> -> vector<8x8xf32>
    %80 = vector.extract_strided_slice %73 {offsets = [0, 64], sizes = [8, 32], strides = [1, 1]} : vector<8x128xf32> to vector<8x32xf32>
    %81 = vector.extract_strided_slice %69 {offsets = [0, 32], sizes = [8, 32], strides = [1, 1]} : vector<8x128xf32> to vector<8x32xf32>
    %cst_47 = arith.constant dense<0.000000e+00> : vector<8x8xf32>
    %82 = tpu.matmul %80, %81, %cst_47 {dimension_numbers = #tpu.dot_dimension_numbers<[1], [1], [0], [0], [0, 0, 1, 0], [], []>} : vector<8x32xf32>, vector<8x32xf32>, vector<8x8xf32> -> vector<8x8xf32>
    %83 = vector.extract_strided_slice %73 {offsets = [0, 96], sizes = [8, 32], strides = [1, 1]} : vector<8x128xf32> to vector<8x32xf32>
    %84 = vector.extract_strided_slice %69 {offsets = [0, 32], sizes = [8, 32], strides = [1, 1]} : vector<8x128xf32> to vector<8x32xf32>
    %cst_48 = arith.constant dense<0.000000e+00> : vector<8x8xf32>
    %85 = tpu.matmul %83, %84, %cst_48 {dimension_numbers = #tpu.dot_dimension_numbers<[1], [1], [0], [0], [0, 0, 1, 0], [], []>} : vector<8x32xf32>, vector<8x32xf32>, vector<8x8xf32> -> vector<8x8xf32>
    %86 = tpu.concatenate %76, %79, %82, %85 in 1 : vector<8x8xf32>, vector<8x8xf32>, vector<8x8xf32>, vector<8x8xf32> -> vector<8x32xf32>
    %87 = arith.addf %86, %70 : vector<8x32xf32>
    %cst_49 = arith.constant dense<0xFF800000> : vector<8xf32>
    %88 = vector.multi_reduction <maximumf>, %87, %cst_49 [1] : vector<8x32xf32> to vector<8xf32>
    %89 = vector.shape_cast %88 : vector<8xf32> to vector<8x1xf32>
    %90 = vector.broadcast %89 : vector<8x1xf32> to vector<8x32xf32>
    %91 = arith.subf %87, %90 : vector<8x32xf32>
    %92 = math.exp %91 : vector<8x32xf32>
    %cst_50 = arith.constant dense<0.000000e+00> : vector<8x32xf32>
    %93 = tpu.matmul %92, %71, %cst_50 {dimension_numbers = #tpu.dot_dimension_numbers<[1], [0], [0], [1], [0, 0, 1, 1], [], []>} : vector<8x32xf32>, vector<32x32xf32>, vector<8x32xf32> -> vector<8x32xf32>
    %94 = tpu.reciprocal %93 {approx = true} : vector<8x32xf32> -> vector<8x32xf32>
    %95 = arith.mulf %92, %94 : vector<8x32xf32>
    %96 = vector.extract_strided_slice %95 {offsets = [0, 0], sizes = [8, 8], strides = [1, 1]} : vector<8x32xf32> to vector<8x8xf32>
    %97 = vector.extract_strided_slice %19 {offsets = [0, 0], sizes = [8, 32], strides = [1, 1]} : vector<8x128xf32> to vector<8x32xf32>
    %cst_51 = arith.constant dense<0.000000e+00> : vector<8x32xf32>
    %98 = tpu.matmul %96, %97, %cst_51 {dimension_numbers = #tpu.dot_dimension_numbers<[1], [0], [0], [1], [0, 0, 1, 1], [], []>} : vector<8x8xf32>, vector<8x32xf32>, vector<8x32xf32> -> vector<8x32xf32>
    %99 = vector.extract_strided_slice %95 {offsets = [0, 8], sizes = [8, 8], strides = [1, 1]} : vector<8x32xf32> to vector<8x8xf32>
    %100 = vector.extract_strided_slice %19 {offsets = [0, 0], sizes = [8, 32], strides = [1, 1]} : vector<8x128xf32> to vector<8x32xf32>
    %cst_52 = arith.constant dense<0.000000e+00> : vector<8x32xf32>
    %101 = tpu.matmul %99, %100, %cst_52 {dimension_numbers = #tpu.dot_dimension_numbers<[1], [0], [0], [1], [0, 0, 1, 1], [], []>} : vector<8x8xf32>, vector<8x32xf32>, vector<8x32xf32> -> vector<8x32xf32>
    %102 = vector.extract_strided_slice %95 {offsets = [0, 16], sizes = [8, 8], strides = [1, 1]} : vector<8x32xf32> to vector<8x8xf32>
    %103 = vector.extract_strided_slice %19 {offsets = [0, 32], sizes = [8, 32], strides = [1, 1]} : vector<8x128xf32> to vector<8x32xf32>
    %cst_53 = arith.constant dense<0.000000e+00> : vector<8x32xf32>
    %104 = tpu.matmul %102, %103, %cst_53 {dimension_numbers = #tpu.dot_dimension_numbers<[1], [0], [0], [1], [0, 0, 1, 1], [], []>} : vector<8x8xf32>, vector<8x32xf32>, vector<8x32xf32> -> vector<8x32xf32>
    %105 = vector.extract_strided_slice %95 {offsets = [0, 24], sizes = [8, 8], strides = [1, 1]} : vector<8x32xf32> to vector<8x8xf32>
    %106 = vector.extract_strided_slice %19 {offsets = [0, 32], sizes = [8, 32], strides = [1, 1]} : vector<8x128xf32> to vector<8x32xf32>
    %cst_54 = arith.constant dense<0.000000e+00> : vector<8x32xf32>
    %107 = tpu.matmul %105, %106, %cst_54 {dimension_numbers = #tpu.dot_dimension_numbers<[1], [0], [0], [1], [0, 0, 1, 1], [], []>} : vector<8x8xf32>, vector<8x32xf32>, vector<8x32xf32> -> vector<8x32xf32>
    %108 = tpu.concatenate %98, %101, %104, %107 in 1 : vector<8x32xf32>, vector<8x32xf32>, vector<8x32xf32>, vector<8x32xf32> -> vector<8x128xf32>
    %109 = arith.truncf %108 : vector<8x128xf32> to vector<8x128xbf16>
    %c0_55 = arith.constant 0 : index
    %c0_56 = arith.constant 0 : index
    %110 = vector.load %arg17[%c0_55, %c0_56] : memref<128x128xbf16, #tpu.memory_space<vmem>>, vector<128x128xbf16>
    %cst_57 = arith.constant dense<0.000000e+00> : vector<8x128xf32>
    %111 = tpu.matmul %109, %110, %cst_57 {dimension_numbers = #tpu.dot_dimension_numbers<[1], [0], [0], [1], [0, 0, 1, 1], [], []>} : vector<8x128xbf16>, vector<128x128xbf16>, vector<8x128xf32> -> vector<8x128xf32>
    %112 = arith.addf %111, %0 : vector<8x128xf32>
    %c0_58 = arith.constant 0 : index
    %c0_59 = arith.constant 0 : index
    %113 = vector.load %arg22[%c0_58, %c0_59] : memref<8x128xf32, #tpu.memory_space<vmem>>, vector<8x128xf32>
    tpu.vector_store %arg22[%c0_58, %c0_59], %112 {strides = array<i32>} : memref<8x128xf32, #tpu.memory_space<vmem>>, vector<8x128xf32>,
    %c0_60 = arith.constant 0 : index
    %c0_61 = arith.constant 0 : index
    %114 = vector.load %arg18[%c0_60, %c0_61] : memref<1x128xf32, #tpu.memory_space<vmem>>, vector<1x128xf32>
    %115 = arith.mulf %112, %112 : vector<8x128xf32>
    %cst_62 = arith.constant dense<0.000000e+00> : vector<8xf32>
    %116 = vector.multi_reduction <add>, %115, %cst_62 [1] : vector<8x128xf32> to vector<8xf32>
    %117 = vector.shape_cast %116 : vector<8xf32> to vector<8x1xf32>
    %cst_63 = arith.constant 1.280000e+02 : f32
    %118 = vector.broadcast %cst_63 : f32 to vector<8x1xf32>
    %119 = arith.divf %117, %118 : vector<8x1xf32>
    %cst_64 = arith.constant 9.99999974E-6 : f32
    %120 = vector.broadcast %cst_64 : f32 to vector<8x1xf32>
    %121 = arith.addf %119, %120 : vector<8x1xf32>
    %122 = math.rsqrt %121 : vector<8x1xf32>
    %123 = vector.broadcast %122 : vector<8x1xf32> to vector<8x128xf32>
    %124 = arith.mulf %112, %123 : vector<8x128xf32>
    %125 = vector.broadcast %114 : vector<1x128xf32> to vector<8x128xf32>
    %126 = arith.mulf %124, %125 : vector<8x128xf32>
    %127 = arith.truncf %126 : vector<8x128xf32> to vector<8x128xbf16>
    %c0_65 = arith.constant 0 : index
    %c0_66 = arith.constant 0 : index
    %128 = vector.load %arg19[%c0_65, %c0_66] : memref<128x256xbf16, #tpu.memory_space<vmem>>, vector<128x256xbf16>
    %cst_67 = arith.constant dense<0.000000e+00> : vector<8x256xf32>
    %129 = tpu.matmul %127, %128, %cst_67 {dimension_numbers = #tpu.dot_dimension_numbers<[1], [0], [0], [1], [0, 0, 1, 1], [], []>} : vector<8x128xbf16>, vector<128x256xbf16>, vector<8x256xf32> -> vector<8x256xf32>
    %130 = vector.extract_strided_slice %129 {offsets = [0, 0], sizes = [8, 128], strides = [1, 1]} : vector<8x256xf32> to vector<8x128xf32>
    %131 = vector.extract_strided_slice %129 {offsets = [0, 128], sizes = [8, 128], strides = [1, 1]} : vector<8x256xf32> to vector<8x128xf32>
    %132 = arith.negf %130 : vector<8x128xf32>
    %133 = math.exp %132 : vector<8x128xf32>
    %cst_68 = arith.constant 1.000000e+00 : f32
    %134 = vector.broadcast %cst_68 : f32 to vector<8x128xf32>
    %135 = arith.addf %134, %133 : vector<8x128xf32>
    %136 = arith.divf %134, %135 : vector<8x128xf32>
    %137 = arith.mulf %130, %136 : vector<8x128xf32>
    %138 = arith.mulf %137, %131 : vector<8x128xf32>
    %139 = arith.truncf %138 : vector<8x128xf32> to vector<8x128xbf16>
    %c0_69 = arith.constant 0 : index
    %c0_70 = arith.constant 0 : index
    %140 = vector.load %arg20[%c0_69, %c0_70] : memref<128x128xbf16, #tpu.memory_space<vmem>>, vector<128x128xbf16>
    %cst_71 = arith.constant dense<0.000000e+00> : vector<8x128xf32>
    %141 = tpu.matmul %139, %140, %cst_71 {dimension_numbers = #tpu.dot_dimension_numbers<[1], [0], [0], [1], [0, 0, 1, 1], [], []>} : vector<8x128xbf16>, vector<128x128xbf16>, vector<8x128xf32> -> vector<8x128xf32>
    %c0_72 = arith.constant 0 : index
    %c0_73 = arith.constant 0 : index
    %142 = vector.load %arg21[%c0_72, %c0_73] : memref<8x128xf32, #tpu.memory_space<vmem>>, vector<8x128xf32>
    tpu.vector_store %arg21[%c0_72, %c0_73], %141 {strides = array<i32>} : memref<8x128xf32, #tpu.memory_space<vmem>>, vector<8x128xf32>,
    return
  }
}

</mosaic_0001>

<llo_original>
// kernel: tile.49
$region0: #{tile.49}
  %s0 = inlined_call_operand.vmem [shape: f32[8,2,32], index: 0, kind: input, shape index: {}]
  %s1 = inlined_call_operand.vmem [shape: f32[8,64], index: 1, kind: output, shape index: {}]
  $region1: #{tile.49} parent=0
    #allocation0 [shape = 'u8[32768]{0}', space=vmem, size = 0x8000, scoped, tag = 'scoped mem for input reshape']
    %s3 = ssub.s32 4, 1
    %s4 = scalar_lea.vmem %s0, 14
    %v5 = vld [vmem:[%s4] sm:%s3]
    %s6 = scalar_lea.vmem [#allocation0], 56
    %7 = vst [vmem:[%s6] sm:%s3] %v5
    %s8 = scalar_lea.vmem %s0, 12
    %v9 = vld [vmem:[%s8] sm:%s3]
    %s10 = scalar_lea.vmem [#allocation0], 48
    %11 = vst [vmem:[%s10] sm:%s3] %v9
    %s12 = scalar_lea.vmem %s0, 10
    %v13 = vld [vmem:[%s12] sm:%s3]
    %s14 = scalar_lea.vmem [#allocation0], 40
    %15 = vst [vmem:[%s14] sm:%s3] %v13
    %s16 = scalar_lea.vmem %s0, 8
    %v17 = vld [vmem:[%s16] sm:%s3]
    %s18 = scalar_lea.vmem [#allocation0], 32
    %19 = vst [vmem:[%s18] sm:%s3] %v17
    %s20 = scalar_lea.vmem %s0, 6
    %v21 = vld [vmem:[%s20] sm:%s3]
    %s22 = scalar_lea.vmem [#allocation0], 24
    %23 = vst [vmem:[%s22] sm:%s3] %v21
    %s24 = scalar_lea.vmem %s0, 4
    %v25 = vld [vmem:[%s24] sm:%s3]
    %s26 = scalar_lea.vmem [#allocation0], 16
    %27 = vst [vmem:[%s26] sm:%s3] %v25
    %s28 = scalar_lea.vmem %s0, 2
    %v29 = vld [vmem:[%s28] sm:%s3]
    %s30 = scalar_lea.vmem [#allocation0], 8
    %31 = vst [vmem:[%s30] sm:%s3] %v29
    %v32 = vld [vmem:[%s0] sm:%s3]
    %33 = vst [vmem:[#allocation0] sm:%s3] %v32
    %v34 = vld [vmem:[#allocation0] ss:$8 sm:$0xf]
    %v35 = vld [vmem:[#allocation0] ss:$8 sm:$0xf0]
    %vm36 = vcmask 1047556
    %v37 = vsel %vm36, %v35, %v34
    %vm38 = vcmask 261120
    %39 = vst.msk [vmem:[%s1] sm:$0xff] %vm38, %v37
    %s40 = scalar_lea.vmem [#allocation0], 1
    %v41 = vld [vmem:[%s40] ss:$8 sm:$0xf]
    %s42 = scalar_lea.vmem [#allocation0], 1
    %v43 = vld [vmem:[%s42] ss:$8 sm:$0xf0]
    %vm44 = vcmask 1047556
    %v45 = vsel %vm44, %v43, %v41
    %46 = vrot.lane.b32.xlu0 %v45, 32
    %v47 = vpop.permute.xlu0 %46
    %vm48 = vcmask 523520
    %49 = vst.msk [vmem:[%s1] sm:$0xff] %vm48, %v47

// kernel: tile.44
$region0: #{tile.44}
  %s0 = inlined_call_operand.vmem [shape: f32[8,4,32], index: 0, kind: input, shape index: {}]
  %s1 = inlined_call_operand.vmem [shape: f32[8,128], index: 1, kind: output, shape index: {}]
  $region1: #{tile.44} parent=0
    #allocation0 [shape = 'u8[32768]{0}', space=vmem, size = 0x8000, scoped, tag = 'scoped mem for input reshape']
    %s3 = ssub.s32 16, 1
    %s4 = scalar_lea.vmem %s0, 28
    %v5 = vld [vmem:[%s4] sm:%s3]
    %s6 = scalar_lea.vmem [#allocation0], 56
    %7 = vst [vmem:[%s6] sm:%s3] %v5
    %s8 = scalar_lea.vmem %s0, 24
    %v9 = vld [vmem:[%s8] sm:%s3]
    %s10 = scalar_lea.vmem [#allocation0], 48
    %11 = vst [vmem:[%s10] sm:%s3] %v9
    %s12 = scalar_lea.vmem %s0, 20
    %v13 = vld [vmem:[%s12] sm:%s3]
    %s14 = scalar_lea.vmem [#allocation0], 40
    %15 = vst [vmem:[%s14] sm:%s3] %v13
    %s16 = scalar_lea.vmem %s0, 16
    %v17 = vld [vmem:[%s16] sm:%s3]
    %s18 = scalar_lea.vmem [#allocation0], 32
    %19 = vst [vmem:[%s18] sm:%s3] %v17
    %s20 = scalar_lea.vmem %s0, 12
    %v21 = vld [vmem:[%s20] sm:%s3]
    %s22 = scalar_lea.vmem [#allocation0], 24
    %23 = vst [vmem:[%s22] sm:%s3] %v21
    %s24 = scalar_lea.vmem %s0, 8
    %v25 = vld [vmem:[%s24] sm:%s3]
    %s26 = scalar_lea.vmem [#allocation0], 16
    %27 = vst [vmem:[%s26] sm:%s3] %v25
    %s28 = scalar_lea.vmem %s0, 4
    %v29 = vld [vmem:[%s28] sm:%s3]
    %s30 = scalar_lea.vmem [#allocation0], 8
    %31 = vst [vmem:[%s30] sm:%s3] %v29
    %v32 = vld [vmem:[%s0] sm:%s3]
    %33 = vst [vmem:[#allocation0] sm:%s3] %v32
    %v34 = vld [vmem:[#allocation0] ss:$8 sm:$0xf]
    %v35 = vld [vmem:[#allocation0] ss:$8 sm:$0xf0]
    %vm36 = vcmask 1047556
    %v37 = vsel %vm36, %v35, %v34
    %vm38 = vcmask 261120
    %39 = vst.msk [vmem:[%s1] sm:$0xff] %vm38, %v37
    %s40 = scalar_lea.vmem [#allocation0], 3
    %v41 = vld [vmem:[%s40] ss:$8 sm:$0xf]
    %s42 = scalar_lea.vmem [#allocation0], 3
    %v43 = vld [vmem:[%s42] ss:$8 sm:$0xf0]
    %vm44 = vcmask 1047556
    %v45 = vsel %vm44, %v43, %v41
    %46 = vrot.lane.b32.xlu0 %v45, 96
    %v47 = vpop.permute.xlu0 %46
    %vm48 = vcmask 1048320
    %49 = vst.msk [vmem:[%s1] sm:$0xff] %vm48, %v47
    %s50 = scalar_lea.vmem [#allocation0], 2
    %v51 = vld [vmem:[%s50] ss:$8 sm:$0xf]
    %s52 = scalar_lea.vmem [#allocation0], 2
    %v53 = vld [vmem:[%s52] ss:$8 sm:$0xf0]
    %vm54 = vcmask 1047556
    %v55 = vsel %vm54, %v53, %v51
    %56 = vrot.lane.b32.xlu0 %v55, 64
    %v57 = vpop.permute.xlu0 %56
    %vm58 = vcmask 785920
    %59 = vst.msk [vmem:[%s1] sm:$0xff] %vm58, %v57
    %s60 = scalar_lea.vmem [#allocation0], 1
    %v61 = vld [vmem:[%s60] ss:$8 sm:$0xf]
    %s62 = scalar_lea.vmem [#allocation0], 1
    %v63 = vld [vmem:[%s62] ss:$8 sm:$0xf0]
    %vm64 = vcmask 1047556
    %v65 = vsel %vm64, %v63, %v61
    %66 = vrot.lane.b32.xlu0 %v65, 32
    %v67 = vpop.permute.xlu0 %66
    %vm68 = vcmask 523520
    %69 = vst.msk [vmem:[%s1] sm:$0xff] %vm68, %v67

// kernel: chameleon_decoder_layer.1
$region0: #{chameleon_decoder_layer.1}
  #allocation0 [shape = 'u32[]', space=smem, size = 0x4, offset = 0x4, fixed_abs, tag = 'smem constant byte address 0x4 - core index']
  #allocation1 [shape = 'u32[72,128]{1,0:T(1,128)}', space=vmem, size = 0x9000, scoped, tag = 'internal scratch']
  %s0 = inlined_call_operand.hbm [shape: f32[8,128], index: 0, kind: input, shape index: {}]
  %s1 = inlined_call_operand.vmem [shape: f32[1,128], index: 1, kind: input, shape index: {}]
  %s2 = inlined_call_operand.vmem [shape: bf16[128,384], index: 2, kind: input, shape index: {}]
  %s3 = inlined_call_operand.hbm [shape: f32[128,128], index: 3, kind: input, shape index: {}]
  %s4 = inlined_call_operand.vmem [shape: f32[128,128], index: 4, kind: input, shape index: {}]
  %s5 = inlined_call_operand.vmem [shape: f32[1,128], index: 5, kind: input, shape index: {}]
  %s6 = inlined_call_operand.vmem [shape: f32[1,128], index: 6, kind: input, shape index: {}]
  %s7 = inlined_call_operand.vmem [shape: f32[1,128], index: 7, kind: input, shape index: {}]
  %s8 = inlined_call_operand.vmem [shape: f32[1,128], index: 8, kind: input, shape index: {}]
  %s9 = inlined_call_operand.vmem [shape: f32[8,128], index: 9, kind: input, shape index: {}]
  %s10 = inlined_call_operand.vmem [shape: f32[8,128], index: 10, kind: input, shape index: {}]
  %s11 = inlined_call_operand.vmem [shape: f32[8,128], index: 11, kind: input, shape index: {}]
  %s12 = inlined_call_operand.vmem [shape: f32[8,128], index: 12, kind: input, shape index: {}]
  %s13 = inlined_call_operand.vmem [shape: f32[8,128], index: 13, kind: input, shape index: {}]
  %s14 = inlined_call_operand.vmem [shape: f32[8,128], index: 14, kind: input, shape index: {}]
  %s15 = inlined_call_operand.vmem [shape: f32[8,32], index: 15, kind: input, shape index: {}]
  %s16 = inlined_call_operand.hbm [shape: f32[32,32], index: 16, kind: input, shape index: {}]
  %s17 = inlined_call_operand.vmem [shape: bf16[128,128], index: 17, kind: input, shape index: {}]
  %s18 = inlined_call_operand.hbm [shape: f32[1,128], index: 18, kind: input, shape index: {}]
  %s19 = inlined_call_operand.vmem [shape: bf16[128,256], index: 19, kind: input, shape index: {}]
  %s20 = inlined_call_operand.hbm [shape: bf16[128,128], index: 20, kind: input, shape index: {}]
  %s21 = inlined_call_operand.hbm [shape: f32[8,128], index: 21, kind: output, shape index: {0}]
  %s22 = inlined_call_operand.hbm [shape: f32[8,128], index: 22, kind: output, shape index: {1}]
  %23 = xla_tuple %s21, %s22
  %s24 = sld [smem:[#allocation0]]
  $region122: #{chameleon_decoder_layer.1} parent=0
    _
  %s26 = ssub.s32 1, %s24
  %s27 = scalar_select 0, %s26, %s24
  $region1: #{chameleon_decoder_layer.1} parent=0
    #allocation2 [shape = 'u8[4096]{0}', space=vmem, size = 0x1000, scoped, tag = 'input window, operand 0, single buffered']
    #allocation3 [shape = 's32[1]{0}', space=sflag, size = 0x4, scoped, tag = 'scoped memory for chameleon_decoder_layer.1']
    #allocation4 [shape = 's32[1]{0}', space=sflag, size = 0x4, scoped, tag = 'scoped memory for chameleon_decoder_layer.1']
    #allocation5 [shape = 'u8[65536]{0}', space=vmem, size = 0x10000, scoped, tag = 'input window, operand 3, single buffered']
    #allocation6 [shape = 's32[1]{0}', space=sflag, size = 0x4, scoped, tag = 'scoped memory for chameleon_decoder_layer.1']
    #allocation7 [shape = 'u8[16384]{0}', space=vmem, size = 0x4000, scoped, tag = 'input window, operand 16, single buffered']
    #allocation8 [shape = 'u8[512]{0}', space=vmem, size = 0x400, scoped, tag = 'input window, operand 18, single buffered']
    #allocation9 [shape = 's32[1]{0}', space=sflag, size = 0x4, scoped, tag = 'scoped memory for chameleon_decoder_layer.1']
    #allocation10 [shape = 'u8[32768]{0}', space=vmem, size = 0x8000, scoped, tag = 'input window, operand 20, single buffered']
    #allocation11 [shape = 'u8[4096]{0}', space=vmem, size = 0x1000, scoped, tag = 'output window, operand 0, single buffered']
    #allocation12 [shape = 'u8[4096]{0}', space=vmem, size = 0x1000, scoped, tag = 'output window, operand 1, single buffered']
    #allocation13 [shape = 's32[1]{0}', space=sflag, size = 0x4, scoped, tag = 'scoped memory for chameleon_decoder_layer.1']
    %28 = vsyncpa [#allocation3], 0
    %29 = vsyncpa [#allocation6], 0
    %30 = vsyncpa [#allocation9], 0
    %31 = vsyncpa [#allocation4], 0
    %32 = vsyncpa [#allocation13], 0
    // Predicated region
    $region2: #{chameleon_decoder_layer.1} parent=1 // pred_check
      _
    $region3: #{chameleon_decoder_layer.1} parent=1 // pred_check_branch
      %34 = sbr.rel (0) target = $region5
    $region4: #{chameleon_decoder_layer.1} parent=1 // pred_region
      %36 = vsyncadd [#allocation3], 0
      %s38 = sshll.u32 %s0, 4
      %s39 = int_to_ptr.hbm [resolvable:$true] %s38
      %s40 = sshll.u32 [#allocation2], 4
      %s41 = int_to_ptr.vmem [resolvable:$true] %s40
      %43 = dma.hbm_to_vmem [thread:$0]  %s39, 128, %s41, [#allocation3]
    $region5: #{chameleon_decoder_layer.1} parent=1 // pred_fallthru
      _
    // Predicated region
    $region6: #{chameleon_decoder_layer.1} parent=1 // pred_check
      _
    $region7: #{chameleon_decoder_layer.1} parent=1 // pred_check_branch
      %45 = sbr.rel (0) target = $region9
    $region8: #{chameleon_decoder_layer.1} parent=1 // pred_region
      _
    $region9: #{chameleon_decoder_layer.1} parent=1 // pred_fallthru
      _
    // Predicated region
    $region10: #{chameleon_decoder_layer.1} parent=1 // pred_check
      _
    $region11: #{chameleon_decoder_layer.1} parent=1 // pred_check_branch
      %47 = sbr.rel (0) target = $region13
    $region12: #{chameleon_decoder_layer.1} parent=1 // pred_region
      _
    $region13: #{chameleon_decoder_layer.1} parent=1 // pred_fallthru
      _
    // Predicated region
    $region14: #{chameleon_decoder_layer.1} parent=1 // pred_check
      _
    $region15: #{chameleon_decoder_layer.1} parent=1 // pred_check_branch
      %49 = sbr.rel (0) target = $region17
    $region16: #{chameleon_decoder_layer.1} parent=1 // pred_region
      %51 = vsyncadd [#allocation6], 0
      %s52 = sshll.u32 %s3, 4
      %s53 = int_to_ptr.hbm [resolvable:$true] %s52
      %s54 = sshll.u32 [#allocation5], 4
      %s55 = int_to_ptr.vmem [resolvable:$true] %s54
      %60 = dma.hbm_to_vmem [thread:$0]  %s53, 2048, %s55, [#allocation6], 128, 128, 8
    $region17: #{chameleon_decoder_layer.1} parent=1 // pred_fallthru
      _
    // Predicated region
    $region18: #{chameleon_decoder_layer.1} parent=1 // pred_check
      _
    $region19: #{chameleon_decoder_layer.1} parent=1 // pred_check_branch
      %62 = sbr.rel (0) target = $region21
    $region20: #{chameleon_decoder_layer.1} parent=1 // pred_region
      _
    $region21: #{chameleon_decoder_layer.1} parent=1 // pred_fallthru
      _
    // Predicated region
    $region22: #{chameleon_decoder_layer.1} parent=1 // pred_check
      _
    $region23: #{chameleon_decoder_layer.1} parent=1 // pred_check_branch
      %64 = sbr.rel (0) target = $region25
    $region24: #{chameleon_decoder_layer.1} parent=1 // pred_region
      _
    $region25: #{chameleon_decoder_layer.1} parent=1 // pred_fallthru
      _
    // Predicated region
    $region26: #{chameleon_decoder_layer.1} parent=1 // pred_check
      _
    $region27: #{chameleon_decoder_layer.1} parent=1 // pred_check_branch
      %66 = sbr.rel (0) target = $region29
    $region28: #{chameleon_decoder_layer.1} parent=1 // pred_region
      _
    $region29: #{chameleon_decoder_layer.1} parent=1 // pred_fallthru
      _
    // Predicated region
    $region30: #{chameleon_decoder_layer.1} parent=1 // pred_check
      _
    $region31: #{chameleon_decoder_layer.1} parent=1 // pred_check_branch
      %68 = sbr.rel (0) target = $region33
    $region32: #{chameleon_decoder_layer.1} parent=1 // pred_region
      _
    $region33: #{chameleon_decoder_layer.1} parent=1 // pred_fallthru
      _
    // Predicated region
    $region34: #{chameleon_decoder_layer.1} parent=1 // pred_check
      _
    $region35: #{chameleon_decoder_layer.1} parent=1 // pred_check_branch
      %70 = sbr.rel (0) target = $region37
    $region36: #{chameleon_decoder_layer.1} parent=1 // pred_region
      _
    $region37: #{chameleon_decoder_layer.1} parent=1 // pred_fallthru
      _
    // Predicated region
    $region38: #{chameleon_decoder_layer.1} parent=1 // pred_check
      _
    $region39: #{chameleon_decoder_layer.1} parent=1 // pred_check_branch
      %72 = sbr.rel (0) target = $region41
    $region40: #{chameleon_decoder_layer.1} parent=1 // pred_region
      _
    $region41: #{chameleon_decoder_layer.1} parent=1 // pred_fallthru
      _
    // Predicated region
    $region42: #{chameleon_decoder_layer.1} parent=1 // pred_check
      _
    $region43: #{chameleon_decoder_layer.1} parent=1 // pred_check_branch
      %74 = sbr.rel (0) target = $region45
    $region44: #{chameleon_decoder_layer.1} parent=1 // pred_region
      _
    $region45: #{chameleon_decoder_layer.1} parent=1 // pred_fallthru
      _
    // Predicated region
    $region46: #{chameleon_decoder_layer.1} parent=1 // pred_check
      _
    $region47: #{chameleon_decoder_layer.1} parent=1 // pred_check_branch
      %76 = sbr.rel (0) target = $region49
    $region48: #{chameleon_decoder_layer.1} parent=1 // pred_region
      _
    $region49: #{chameleon_decoder_layer.1} parent=1 // pred_fallthru
      _
    // Predicated region
    $region50: #{chameleon_decoder_layer.1} parent=1 // pred_check
      _
    $region51: #{chameleon_decoder_layer.1} parent=1 // pred_check_branch
      %78 = sbr.rel (0) target = $region53
    $region52: #{chameleon_decoder_layer.1} parent=1 // pred_region
      _
    $region53: #{chameleon_decoder_layer.1} parent=1 // pred_fallthru
      _
    // Predicated region
    $region54: #{chameleon_decoder_layer.1} parent=1 // pred_check
      _
    $region55: #{chameleon_decoder_layer.1} parent=1 // pred_check_branch
      %80 = sbr.rel (0) target = $region57
    $region56: #{chameleon_decoder_layer.1} parent=1 // pred_region
      _
    $region57: #{chameleon_decoder_layer.1} parent=1 // pred_fallthru
      _
    // Predicated region
    $region58: #{chameleon_decoder_layer.1} parent=1 // pred_check
      _
    $region59: #{chameleon_decoder_layer.1} parent=1 // pred_check_branch
      %82 = sbr.rel (0) target = $region61
    $region60: #{chameleon_decoder_layer.1} parent=1 // pred_region
      _
    $region61: #{chameleon_decoder_layer.1} parent=1 // pred_fallthru
      _
    // Predicated region
    $region62: #{chameleon_decoder_layer.1} parent=1 // pred_check
      _
    $region63: #{chameleon_decoder_layer.1} parent=1 // pred_check_branch
      %84 = sbr.rel (0) target = $region65
    $region64: #{chameleon_decoder_layer.1} parent=1 // pred_region
      _
    $region65: #{chameleon_decoder_layer.1} parent=1 // pred_fallthru
      _
    // Predicated region
    $region66: #{chameleon_decoder_layer.1} parent=1 // pred_check
      _
    $region67: #{chameleon_decoder_layer.1} parent=1 // pred_check_branch
      %86 = sbr.rel (0) target = $region69
    $region68: #{chameleon_decoder_layer.1} parent=1 // pred_region
      %88 = vsyncadd [#allocation6], 0
      %s89 = sshll.u32 %s16, 4
      %s90 = int_to_ptr.hbm [resolvable:$true] %s89
      %s91 = sshll.u32 [#allocation7], 4
      %s92 = int_to_ptr.vmem [resolvable:$true] %s91
      %97 = dma.hbm_to_vmem [thread:$0]  %s90, 512, %s92, [#allocation6], 128, 128, 8
    $region69: #{chameleon_decoder_layer.1} parent=1 // pred_fallthru
      _
    // Predicated region
    $region70: #{chameleon_decoder_layer.1} parent=1 // pred_check
      _
    $region71: #{chameleon_decoder_layer.1} parent=1 // pred_check_branch
      %99 = sbr.rel (0) target = $region73
    $region72: #{chameleon_decoder_layer.1} parent=1 // pred_region
      _
    $region73: #{chameleon_decoder_layer.1} parent=1 // pred_fallthru
      _
    // Predicated region
    $region74: #{chameleon_decoder_layer.1} parent=1 // pred_check
      _
    $region75: #{chameleon_decoder_layer.1} parent=1 // pred_check_branch
      %101 = sbr.rel (0) target = $region77
    $region76: #{chameleon_decoder_layer.1} parent=1 // pred_region
      %103 = vsyncadd [#allocation9], 0
      %s105 = sshll.u32 %s18, 4
      %s106 = int_to_ptr.hbm [resolvable:$true] %s105
      %s107 = sshll.u32 [#allocation8], 4
      %s108 = int_to_ptr.vmem [resolvable:$true] %s107
      %110 = dma.hbm_to_vmem [thread:$0]  %s106, 16, %s108, [#allocation9]
    $region77: #{chameleon_decoder_layer.1} parent=1 // pred_fallthru
      _
    // Predicated region
    $region78: #{chameleon_decoder_layer.1} parent=1 // pred_check
      _
    $region79: #{chameleon_decoder_layer.1} parent=1 // pred_check_branch
      %112 = sbr.rel (0) target = $region81
    $region80: #{chameleon_decoder_layer.1} parent=1 // pred_region
      _
    $region81: #{chameleon_decoder_layer.1} parent=1 // pred_fallthru
      _
    // Predicated region
    $region82: #{chameleon_decoder_layer.1} parent=1 // pred_check
      _
    $region83: #{chameleon_decoder_layer.1} parent=1 // pred_check_branch
      %114 = sbr.rel (0) target = $region85
    $region84: #{chameleon_decoder_layer.1} parent=1 // pred_region
      %116 = vsyncadd [#allocation9], 0
      %s117 = sshll.u32 %s20, 4
      %s118 = int_to_ptr.hbm [resolvable:$true] %s117
      %s119 = sshll.u32 [#allocation10], 4
      %s120 = int_to_ptr.vmem [resolvable:$true] %s119
      %125 = dma.hbm_to_vmem [thread:$0]  %s118, 1024, %s120, [#allocation9], 64, 64, 4
    $region85: #{chameleon_decoder_layer.1} parent=1 // pred_fallthru
      _
    // Predicated region
    $region86: #{chameleon_decoder_layer.1} parent=1 // pred_check
      _
    $region87: #{chameleon_decoder_layer.1} parent=1 // pred_check_branch
      %127 = sbr.rel (0) target = $region89
    $region88: #{chameleon_decoder_layer.1} parent=1 // pred_region
      %129 = dma.done [#allocation3], 128
    $region89: #{chameleon_decoder_layer.1} parent=1 // pred_fallthru
      _
    // Predicated region
    $region90: #{chameleon_decoder_layer.1} parent=1 // pred_check
      _
    $region91: #{chameleon_decoder_layer.1} parent=1 // pred_check_branch
      %131 = sbr.rel (0) target = $region93
    $region92: #{chameleon_decoder_layer.1} parent=1 // pred_region
      %133 = dma.done [#allocation6], 2048
    $region93: #{chameleon_decoder_layer.1} parent=1 // pred_fallthru
      _
    // Predicated region
    $region94: #{chameleon_decoder_layer.1} parent=1 // pred_check
      _
    $region95: #{chameleon_decoder_layer.1} parent=1 // pred_check_branch
      %135 = sbr.rel (0) target = $region97
    $region96: #{chameleon_decoder_layer.1} parent=1 // pred_region
      %137 = dma.done [#allocation6], 512
    $region97: #{chameleon_decoder_layer.1} parent=1 // pred_fallthru
      _
    // Predicated region
    $region98: #{chameleon_decoder_layer.1} parent=1 // pred_check
      _
    $region99: #{chameleon_decoder_layer.1} parent=1 // pred_check_branch
      %139 = sbr.rel (0) target = $region101
    $region100: #{chameleon_decoder_layer.1} parent=1 // pred_region
      %141 = dma.done [#allocation9], 16
    $region101: #{chameleon_decoder_layer.1} parent=1 // pred_fallthru
      _
    // Predicated region
    $region102: #{chameleon_decoder_layer.1} parent=1 // pred_check
      _
    $region103: #{chameleon_decoder_layer.1} parent=1 // pred_check_branch
      %143 = sbr.rel (0) target = $region105
    $region104: #{chameleon_decoder_layer.1} parent=1 // pred_region
      %145 = dma.done [#allocation9], 1024
    $region105: #{chameleon_decoder_layer.1} parent=1 // pred_fallthru
      _
    %v146 = vld [vmem:[#allocation2] sm:$0xff]
    %v147 = vld [vmem:[%s1] sm:$0x1]
    %v148 = vmul.f32 %v146, %v146
    %149 = vadd.xlane.f32.xlu0 %v148
    %v150 = vpop.xlane.xlu0 %149
    %v151 = vrcp.pop 128.0
    %v152 = vmul.f32 128.0, %v151
    %v153 = vsub.f32 1.0, %v152
    %v154 = vmul.f32 %v151, %v153
    %v155 = vadd.f32 %v151, %v154
    %vm156 = vweird.f32 %v151
    %v157 = vsel %vm156, %v151, %v155
    %v158 = vmul.f32 %v150, %v157
    %v159 = vadd.f32 %v158, 1e-05
    %v160 = vrsqrt.pop %v159
    %v161 = vmul.f32 %v160, %v159
    %v162 = vmul.f32 %v161, %v160
    %v163 = vmul.f32 0.5, %v162
    %v164 = vsub.f32 1.5, %v163
    %v165 = vmul.f32 %v160, %v164
    %vm166 = vweird.f32 %v159
    %vm167 = vweird.f32 %v160
    %vm168 = vmor %vm166, %vm167
    %v169 = vsel %vm168, %v160, %v165
    %v170 = vmul.f32 %v146, %v169
    %v172 = vperm.slane %v147, 0
    %v174 = vmul.f32 %v170, %v172
    %v175 = vpack.c.bf16 %v174, %v174
    %v176 = vld [vmem:[%s2] sm:$0xff]
    %v177 = vld [vmem:[%s2 + $0x8] sm:$0xf]
    %v178 = vld [vmem:[%s2 + $0xc] sm:$0xff]
    %v179 = vld [vmem:[%s2 + $0x14] sm:$0xf]
    %v180 = vld [vmem:[%s2 + $0x18] sm:$0xff]
    %v181 = vld [vmem:[%s2 + $0x20] sm:$0xf]
    %v182 = vld [vmem:[%s2 + $0x24] sm:$0xff]
    %v183 = vld [vmem:[%s2 + $0x2c] sm:$0xf]
    %v184 = vld [vmem:[%s2 + $0x30] sm:$0xff]
    %v185 = vld [vmem:[%s2 + $0x38] sm:$0xf]
    %v186 = vld [vmem:[%s2 + $0x3c] sm:$0xff]
    %v187 = vld [vmem:[%s2 + $0x44] sm:$0xf]
    %v188 = vld [vmem:[%s2 + $0x48] sm:$0xff]
    %v189 = vld [vmem:[%s2 + $0x50] sm:$0xf]
    %v190 = vld [vmem:[%s2 + $0x54] sm:$0xff]
    %v191 = vld [vmem:[%s2 + $0x5c] sm:$0xf]
    %v192 = vld [vmem:[%s2 + $0x60] sm:$0xff]
    %v193 = vld [vmem:[%s2 + $0x68] sm:$0xf]
    %v194 = vld [vmem:[%s2 + $0x6c] sm:$0xff]
    %v195 = vld [vmem:[%s2 + $0x74] sm:$0xf]
    %v196 = vld [vmem:[%s2 + $0x78] sm:$0xff]
    %v197 = vld [vmem:[%s2 + $0x80] sm:$0xf]
    %v198 = vld [vmem:[%s2 + $0x84] sm:$0xff]
    %v199 = vld [vmem:[%s2 + $0x8c] sm:$0xf]
    %v200 = vld [vmem:[%s2 + $0x90] sm:$0xff]
    %v201 = vld [vmem:[%s2 + $0x98] sm:$0xf]
    %v202 = vld [vmem:[%s2 + $0x9c] sm:$0xff]
    %v203 = vld [vmem:[%s2 + $0xa4] sm:$0xf]
    %v204 = vld [vmem:[%s2 + $0xa8] sm:$0xff]
    %v205 = vld [vmem:[%s2 + $0xb0] sm:$0xf]
    %v206 = vld [vmem:[%s2 + $0xb4] sm:$0xff]
    %v207 = vld [vmem:[%s2 + $0xbc] sm:$0xf]
    %v240 = vunpack.c.l.b16 %v176
    %v241 = vunpack.c.h.b16 %v176
    %v242 = vunpack.c.l.b16 %v177
    %v243 = vunpack.c.l.b16 %v178
    %v244 = vunpack.c.h.b16 %v178
    %v245 = vunpack.c.l.b16 %v179
    %v246 = vunpack.c.l.b16 %v180
    %v247 = vunpack.c.h.b16 %v180
    %v248 = vunpack.c.l.b16 %v181
    %v249 = vunpack.c.l.b16 %v182
    %v250 = vunpack.c.h.b16 %v182
    %v251 = vunpack.c.l.b16 %v183
    %v252 = vunpack.c.l.b16 %v184
    %v253 = vunpack.c.h.b16 %v184
    %v254 = vunpack.c.l.b16 %v185
    %v255 = vunpack.c.l.b16 %v186
    %v256 = vunpack.c.h.b16 %v186
    %v257 = vunpack.c.l.b16 %v187
    %v258 = vunpack.c.l.b16 %v188
    %v259 = vunpack.c.h.b16 %v188
    %v260 = vunpack.c.l.b16 %v189
    %v261 = vunpack.c.l.b16 %v190
    %v262 = vunpack.c.h.b16 %v190
    %v263 = vunpack.c.l.b16 %v191
    %v264 = vunpack.c.l.b16 %v192
    %v265 = vunpack.c.h.b16 %v192
    %v266 = vunpack.c.l.b16 %v193
    %v267 = vunpack.c.l.b16 %v194
    %v268 = vunpack.c.h.b16 %v194
    %v269 = vunpack.c.l.b16 %v195
    %v270 = vunpack.c.l.b16 %v196
    %v271 = vunpack.c.h.b16 %v196
    %v272 = vunpack.c.l.b16 %v197
    %v273 = vunpack.c.l.b16 %v198
    %v274 = vunpack.c.h.b16 %v198
    %v275 = vunpack.c.l.b16 %v199
    %v276 = vunpack.c.l.b16 %v200
    %v277 = vunpack.c.h.b16 %v200
    %v278 = vunpack.c.l.b16 %v201
    %v279 = vunpack.c.l.b16 %v202
    %v280 = vunpack.c.h.b16 %v202
    %v281 = vunpack.c.l.b16 %v203
    %v282 = vunpack.c.l.b16 %v204
    %v283 = vunpack.c.h.b16 %v204
    %v284 = vunpack.c.l.b16 %v205
    %v285 = vunpack.c.l.b16 %v206
    %v286 = vunpack.c.h.b16 %v206
    %v287 = vunpack.c.l.b16 %v207
    %v288 = vpack.c.b16 %v243, %v240
    %v289 = vpack.c.b16 %v244, %v241
    %v290 = vpack.c.b16 %v245, %v242
    %v291 = vpack.c.b16 %v249, %v246
    %v292 = vpack.c.b16 %v250, %v247
    %v293 = vpack.c.b16 %v251, %v248
    %v294 = vpack.c.b16 %v255, %v252
    %v295 = vpack.c.b16 %v256, %v253
    %v296 = vpack.c.b16 %v257, %v254
    %v297 = vpack.c.b16 %v261, %v258
    %v298 = vpack.c.b16 %v262, %v259
    %v299 = vpack.c.b16 %v263, %v260
    %v300 = vpack.c.b16 %v267, %v264
    %v301 = vpack.c.b16 %v268, %v265
    %v302 = vpack.c.b16 %v269, %v266
    %v303 = vpack.c.b16 %v273, %v270
    %v304 = vpack.c.b16 %v274, %v271
    %v305 = vpack.c.b16 %v275, %v272
    %v306 = vpack.c.b16 %v279, %v276
    %v307 = vpack.c.b16 %v280, %v277
    %v308 = vpack.c.b16 %v281, %v278
    %v309 = vpack.c.b16 %v285, %v282
    %v310 = vpack.c.b16 %v286, %v283
    %v311 = vpack.c.b16 %v287, %v284
    %336 = vmatpush.bf16.msra.mxu0 %v309
    %337 = vmatpush.bf16.msra.mxu0 %v306
    %338 = vmatpush.bf16.msra.mxu0 %v303
    %339 = vmatpush.bf16.msra.mxu0 %v300
    %340 = vmatpush.bf16.msra.mxu0 %v297
    %341 = vmatpush.bf16.msra.mxu0 %v294
    %342 = vmatpush.bf16.msra.mxu0 %v291
    %343 = vmatpush.bf16.msra.mxu0 %v288
    %344 = vmatmul.bf16.gmra.mxu0 %v175
    %v345 = vpop.f32.mrf.mxu0
    %v346 = vadd.f32 0.0, %v345
    %v347 = vpop.f32.mrf.mxu0
    %348 = vdwg.mxu0
    %349 = vmatpush.bf16.msra.mxu0 %v310
    %350 = vmatpush.bf16.msra.mxu0 %v307
    %351 = vmatpush.bf16.msra.mxu0 %v304
    %352 = vmatpush.bf16.msra.mxu0 %v301
    %353 = vmatpush.bf16.msra.mxu0 %v298
    %354 = vmatpush.bf16.msra.mxu0 %v295
    %355 = vmatpush.bf16.msra.mxu0 %v292
    %356 = vmatpush.bf16.msra.mxu0 %v289
    %357 = vmatmul.bf16.gmra.mxu0 %v175
    %v358 = vpop.f32.mrf.mxu0
    %v359 = vadd.f32 0.0, %v358
    %v360 = vpop.f32.mrf.mxu0
    %361 = vdwg.mxu0
    %362 = vmatpush.bf16.msra.mxu0 %v311
    %363 = vmatpush.bf16.msra.mxu0 %v308
    %364 = vmatpush.bf16.msra.mxu0 %v305
    %365 = vmatpush.bf16.msra.mxu0 %v302
    %366 = vmatpush.bf16.msra.mxu0 %v299
    %367 = vmatpush.bf16.msra.mxu0 %v296
    %368 = vmatpush.bf16.msra.mxu0 %v293
    %369 = vmatpush.bf16.msra.mxu0 %v290
    %370 = vmatmul.bf16.gmra.mxu0 %v175
    %v371 = vpop.f32.mrf.mxu0
    %v372 = vadd.f32 0.0, %v371
    %v373 = vpop.f32.mrf.mxu0
    %374 = vdwg.mxu0
    %v375 = vld [vmem:[#allocation5] sm:$0xff]
    %v376 = vld [vmem:[#allocation5 + $0x8] sm:$0xff]
    %v377 = vld [vmem:[#allocation5 + $0x10] sm:$0xff]
    %v378 = vld [vmem:[#allocation5 + $0x18] sm:$0xff]
    %v379 = vld [vmem:[#allocation5 + $0x20] sm:$0xff]
    %v380 = vld [vmem:[#allocation5 + $0x28] sm:$0xff]
    %v381 = vld [vmem:[#allocation5 + $0x30] sm:$0xff]
    %v382 = vld [vmem:[#allocation5 + $0x38] sm:$0xff]
    %v383 = vld [vmem:[#allocation5 + $0x40] sm:$0xff]
    %v384 = vld [vmem:[#allocation5 + $0x48] sm:$0xff]
    %v385 = vld [vmem:[#allocation5 + $0x50] sm:$0xff]
    %v386 = vld [vmem:[#allocation5 + $0x58] sm:$0xff]
    %v387 = vld [vmem:[#allocation5 + $0x60] sm:$0xff]
    %v388 = vld [vmem:[#allocation5 + $0x68] sm:$0xff]
    %v389 = vld [vmem:[#allocation5 + $0x70] sm:$0xff]
    %v390 = vld [vmem:[#allocation5 + $0x78] sm:$0xff]
    %v391 = vld [vmem:[%s5] sm:$0x1]
    %v392 = vld [vmem:[%s6] sm:$0x1]
    %v393 = vld [vmem:[%s9] sm:$0xff]
    %v394 = vld [vmem:[%s10] sm:$0xff]
    %v395 = vld [vmem:[%s11] sm:$0xff]
    %396 = vmatpush.msra.mxu0 %v390
    %397 = vmatpush.msra.mxu0 %v389
    %398 = vmatpush.msra.mxu0 %v388
    %399 = vmatpush.msra.mxu0 %v387
    %400 = vmatpush.msra.mxu0 %v386
    %401 = vmatpush.msra.mxu0 %v385
    %402 = vmatpush.msra.mxu0 %v384
    %403 = vmatpush.msra.mxu0 %v383
    %404 = vmatpush.msra.mxu0 %v382
    %405 = vmatpush.msra.mxu0 %v381
    %406 = vmatpush.msra.mxu0 %v380
    %407 = vmatpush.msra.mxu0 %v379
    %408 = vmatpush.msra.mxu0 %v378
    %409 = vmatpush.msra.mxu0 %v377
    %410 = vmatpush.msra.mxu0 %v376
    %411 = vmatpush.msra.mxu0 %v375
    %412 = vmatmul.f32.gmra.mxu0 %v346
    %v413 = vpop.f32.mrf.mxu0
    %v414 = vadd.f32 0.0, %v413
    %415 = vdwg.mxu0
    %v416 = vsub.f32 %v346, %v414
    %v417 = vmul.f32 %v416, %v416
    %418 = vmatpush.msra.mxu0 %v390
    %419 = vmatpush.msra.mxu0 %v389
    %420 = vmatpush.msra.mxu0 %v388
    %421 = vmatpush.msra.mxu0 %v387
    %422 = vmatpush.msra.mxu0 %v386
    %423 = vmatpush.msra.mxu0 %v385
    %424 = vmatpush.msra.mxu0 %v384
    %425 = vmatpush.msra.mxu0 %v383
    %426 = vmatpush.msra.mxu0 %v382
    %427 = vmatpush.msra.mxu0 %v381
    %428 = vmatpush.msra.mxu0 %v380
    %429 = vmatpush.msra.mxu0 %v379
    %430 = vmatpush.msra.mxu0 %v378
    %431 = vmatpush.msra.mxu0 %v377
    %432 = vmatpush.msra.mxu0 %v376
    %433 = vmatpush.msra.mxu0 %v375
    %434 = vmatmul.f32.gmra.mxu0 %v417
    %v435 = vpop.f32.mrf.mxu0
    %v436 = vadd.f32 1e-05, %v435
    %437 = vdwg.mxu0
    %v438 = vrsqrt.pop %v436
    %v439 = vmul.f32 %v438, %v436
    %v440 = vmul.f32 %v439, %v438
    %v441 = vmul.f32 0.5, %v440
    %v442 = vsub.f32 1.5, %v441
    %v443 = vmul.f32 %v438, %v442
    %vm444 = vweird.f32 %v436
    %vm445 = vweird.f32 %v438
    %vm446 = vmor %vm444, %vm445
    %v447 = vsel %vm446, %v438, %v443
    %v448 = vmul.f32 %v416, %v447
    %v450 = vperm.slane %v391, 0
    %v452 = vmul.f32 %v448, %v450
    %v454 = vperm.slane %v392, 0
    %v456 = vadd.f32 %v452, %v454
    %457 = vrot.lane.b32.xlu0 %v456, 112
    %v458 = vpop.permute.xlu0 %457
    %459 = vrot.lane.b32.xlu0 %v456, 16
    %v460 = vpop.permute.xlu0 %459
    %v461 = vmul.f32 %v456, %v393
    %v462 = vmul.f32 %v458, %v394
    %v463 = vadd.f32 %v461, %v462
    %v464 = vmul.f32 %v460, %v395
    %v465 = vadd.f32 %v463, %v464
    %v466 = vld [vmem:[%s4] sm:$0xff]
    %v467 = vld [vmem:[%s4 + $0x8] sm:$0xff]
    %v468 = vld [vmem:[%s4 + $0x10] sm:$0xff]
    %v469 = vld [vmem:[%s4 + $0x18] sm:$0xff]
    %v470 = vld [vmem:[%s4 + $0x20] sm:$0xff]
    %v471 = vld [vmem:[%s4 + $0x28] sm:$0xff]
    %v472 = vld [vmem:[%s4 + $0x30] sm:$0xff]
    %v473 = vld [vmem:[%s4 + $0x38] sm:$0xff]
    %v474 = vld [vmem:[%s4 + $0x40] sm:$0xff]
    %v475 = vld [vmem:[%s4 + $0x48] sm:$0xff]
    %v476 = vld [vmem:[%s4 + $0x50] sm:$0xff]
    %v477 = vld [vmem:[%s4 + $0x58] sm:$0xff]
    %v478 = vld [vmem:[%s4 + $0x60] sm:$0xff]
    %v479 = vld [vmem:[%s4 + $0x68] sm:$0xff]
    %v480 = vld [vmem:[%s4 + $0x70] sm:$0xff]
    %v481 = vld [vmem:[%s4 + $0x78] sm:$0xff]
    %v482 = vld [vmem:[%s7] sm:$0x1]
    %v483 = vld [vmem:[%s8] sm:$0x1]
    %v484 = vld [vmem:[%s12] sm:$0xff]
    %v485 = vld [vmem:[%s13] sm:$0xff]
    %v486 = vld [vmem:[%s14] sm:$0xff]
    %487 = vmatpush.msra.mxu0 %v481
    %488 = vmatpush.msra.mxu0 %v480
    %489 = vmatpush.msra.mxu0 %v479
    %490 = vmatpush.msra.mxu0 %v478
    %491 = vmatpush.msra.mxu0 %v477
    %492 = vmatpush.msra.mxu0 %v476
    %493 = vmatpush.msra.mxu0 %v475
    %494 = vmatpush.msra.mxu0 %v474
    %495 = vmatpush.msra.mxu0 %v473
    %496 = vmatpush.msra.mxu0 %v472
    %497 = vmatpush.msra.mxu0 %v471
    %498 = vmatpush.msra.mxu0 %v470
    %499 = vmatpush.msra.mxu0 %v469
    %500 = vmatpush.msra.mxu0 %v468
    %501 = vmatpush.msra.mxu0 %v467
    %502 = vmatpush.msra.mxu0 %v466
    %503 = vmatmul.f32.gmra.mxu0 %v359
    %v504 = vpop.f32.mrf.mxu0
    %v505 = vadd.f32 0.0, %v504
    %506 = vdwg.mxu0
    %v507 = vsub.f32 %v359, %v505
    %v508 = vmul.f32 %v507, %v507
    %509 = vmatpush.msra.mxu0 %v481
    %510 = vmatpush.msra.mxu0 %v480
    %511 = vmatpush.msra.mxu0 %v479
    %512 = vmatpush.msra.mxu0 %v478
    %513 = vmatpush.msra.mxu0 %v477
    %514 = vmatpush.msra.mxu0 %v476
    %515 = vmatpush.msra.mxu0 %v475
    %516 = vmatpush.msra.mxu0 %v474
    %517 = vmatpush.msra.mxu0 %v473
    %518 = vmatpush.msra.mxu0 %v472
    %519 = vmatpush.msra.mxu0 %v471
    %520 = vmatpush.msra.mxu0 %v470
    %521 = vmatpush.msra.mxu0 %v469
    %522 = vmatpush.msra.mxu0 %v468
    %523 = vmatpush.msra.mxu0 %v467
    %524 = vmatpush.msra.mxu0 %v466
    %525 = vmatmul.f32.gmra.mxu0 %v508
    %v526 = vpop.f32.mrf.mxu0
    %v527 = vadd.f32 1e-05, %v526
    %528 = vdwg.mxu0
    %v529 = vrsqrt.pop %v527
    %v530 = vmul.f32 %v529, %v527
    %v531 = vmul.f32 %v530, %v529
    %v532 = vmul.f32 0.5, %v531
    %v533 = vsub.f32 1.5, %v532
    %v534 = vmul.f32 %v529, %v533
    %vm535 = vweird.f32 %v527
    %vm536 = vweird.f32 %v529
    %vm537 = vmor %vm535, %vm536
    %v538 = vsel %vm537, %v529, %v534
    %v539 = vmul.f32 %v507, %v538
    %v541 = vperm.slane %v482, 0
    %v543 = vmul.f32 %v539, %v541
    %v545 = vperm.slane %v483, 0
    %v547 = vadd.f32 %v543, %v545
    %548 = vrot.lane.b32.xlu0 %v547, 112
    %v549 = vpop.permute.xlu0 %548
    %550 = vrot.lane.b32.xlu0 %v547, 16
    %v551 = vpop.permute.xlu0 %550
    %v552 = vmul.f32 %v547, %v484
    %v553 = vmul.f32 %v549, %v485
    %v554 = vadd.f32 %v552, %v553
    %v555 = vmul.f32 %v551, %v486
    %v556 = vadd.f32 %v554, %v555
    %v557 = vld [vmem:[%s15] sm:$0xff]
    %v558 = vld [vmem:[#allocation7] sm:$0xff]
    %v559 = vld [vmem:[#allocation7 + $0x8] sm:$0xff]
    %v560 = vld [vmem:[#allocation7 + $0x10] sm:$0xff]
    %v561 = vld [vmem:[#allocation7 + $0x18] sm:$0xff]
    %v562 = vmul.f32 %v465, 0.17677669
    %vm563 = vcmask 261120
    %v565 = vsel %vm563, %v562, 0
    %v568 = vsel %vm563, %v556, 0
    %570 = vmatpush.xpose.msra.mxu0 0.0
    %571 = vmatpush.xpose.msra.mxu0 0.0
    %572 = vmatpush.xpose.msra.mxu0 0.0
    %573 = vmatpush.xpose.msra.mxu0 0.0
    %574 = vmatpush.xpose.msra.mxu0 0.0
    %575 = vmatpush.xpose.msra.mxu0 0.0
    %576 = vmatpush.xpose.msra.mxu0 0.0
    %577 = vmatpush.xpose.msra.mxu0 0.0
    %578 = vmatpush.xpose.msra.mxu0 0.0
    %579 = vmatpush.xpose.msra.mxu0 0.0
    %580 = vmatpush.xpose.msra.mxu0 0.0
    %581 = vmatpush.xpose.msra.mxu0 0.0
    %582 = vmatpush.xpose.msra.mxu0 0.0
    %583 = vmatpush.xpose.msra.mxu0 0.0
    %584 = vmatpush.xpose.msra.mxu0 0.0
    %585 = vmatpush.xpose.msra.mxu0 %v568
    %586 = vmatmul.f32.gmra.mxu0 %v565
    %v587 = vpop.f32.mrf.mxu0
    %v588 = vadd.f32 0.0, %v587
    %589 = vdwg.mxu0
    %590 = vrot.lane.b32.xlu0 %v562, 96
    %v591 = vpop.permute.xlu0 %590
    %v592 = vsel %vm563, %v591, 0
    %594 = vmatpush.xpose.msra.mxu0 0.0
    %595 = vmatpush.xpose.msra.mxu0 0.0
    %596 = vmatpush.xpose.msra.mxu0 0.0
    %597 = vmatpush.xpose.msra.mxu0 0.0
    %598 = vmatpush.xpose.msra.mxu0 0.0
    %599 = vmatpush.xpose.msra.mxu0 0.0
    %600 = vmatpush.xpose.msra.mxu0 0.0
    %601 = vmatpush.xpose.msra.mxu0 0.0
    %602 = vmatpush.xpose.msra.mxu0 0.0
    %603 = vmatpush.xpose.msra.mxu0 0.0
    %604 = vmatpush.xpose.msra.mxu0 0.0
    %605 = vmatpush.xpose.msra.mxu0 0.0
    %606 = vmatpush.xpose.msra.mxu0 0.0
    %607 = vmatpush.xpose.msra.mxu0 0.0
    %608 = vmatpush.xpose.msra.mxu0 0.0
    %609 = vmatpush.xpose.msra.mxu0 %v568
    %610 = vmatmul.f32.gmra.mxu0 %v592
    %v611 = vpop.f32.mrf.mxu0
    %v612 = vadd.f32 0.0, %v611
    %613 = vdwg.mxu0
    %614 = vrot.lane.b32.xlu0 %v562, 64
    %v615 = vpop.permute.xlu0 %614
    %616 = vrot.lane.b32.xlu0 %v556, 96
    %v617 = vpop.permute.xlu0 %616
    %v618 = vsel %vm563, %v615, 0
    %v620 = vsel %vm563, %v617, 0
    %622 = vmatpush.xpose.msra.mxu0 0.0
    %623 = vmatpush.xpose.msra.mxu0 0.0
    %624 = vmatpush.xpose.msra.mxu0 0.0
    %625 = vmatpush.xpose.msra.mxu0 0.0
    %626 = vmatpush.xpose.msra.mxu0 0.0
    %627 = vmatpush.xpose.msra.mxu0 0.0
    %628 = vmatpush.xpose.msra.mxu0 0.0
    %629 = vmatpush.xpose.msra.mxu0 0.0
    %630 = vmatpush.xpose.msra.mxu0 0.0
    %631 = vmatpush.xpose.msra.mxu0 0.0
    %632 = vmatpush.xpose.msra.mxu0 0.0
    %633 = vmatpush.xpose.msra.mxu0 0.0
    %634 = vmatpush.xpose.msra.mxu0 0.0
    %635 = vmatpush.xpose.msra.mxu0 0.0
    %636 = vmatpush.xpose.msra.mxu0 0.0
    %637 = vmatpush.xpose.msra.mxu0 %v620
    %638 = vmatmul.f32.gmra.mxu0 %v618
    %v639 = vpop.f32.mrf.mxu0
    %v640 = vadd.f32 0.0, %v639
    %641 = vdwg.mxu0
    %642 = vrot.lane.b32.xlu0 %v562, 32
    %v643 = vpop.permute.xlu0 %642
    %v644 = vsel %vm563, %v643, 0
    %646 = vmatpush.xpose.msra.mxu0 0.0
    %647 = vmatpush.xpose.msra.mxu0 0.0
    %648 = vmatpush.xpose.msra.mxu0 0.0
    %649 = vmatpush.xpose.msra.mxu0 0.0
    %650 = vmatpush.xpose.msra.mxu0 0.0
    %651 = vmatpush.xpose.msra.mxu0 0.0
    %652 = vmatpush.xpose.msra.mxu0 0.0
    %653 = vmatpush.xpose.msra.mxu0 0.0
    %654 = vmatpush.xpose.msra.mxu0 0.0
    %655 = vmatpush.xpose.msra.mxu0 0.0
    %656 = vmatpush.xpose.msra.mxu0 0.0
    %657 = vmatpush.xpose.msra.mxu0 0.0
    %658 = vmatpush.xpose.msra.mxu0 0.0
    %659 = vmatpush.xpose.msra.mxu0 0.0
    %660 = vmatpush.xpose.msra.mxu0 0.0
    %661 = vmatpush.xpose.msra.mxu0 %v620
    %662 = vmatmul.f32.gmra.mxu0 %v644
    %v663 = vpop.f32.mrf.mxu0
    %v664 = vadd.f32 0.0, %v663
    %665 = vdwg.mxu0
    %667 = vrot.lane.b32.xlu0 %v612, 8
    %v668 = vpop.permute.xlu0 %667
    %671 = vrot.lane.b32.xlu0 %v640, 16
    %v672 = vpop.permute.xlu0 %671
    %675 = vrot.lane.b32.xlu0 %v664, 24
    %v676 = vpop.permute.xlu0 %675
    %vm678 = vcmask 64512
    %v679 = vsel %vm678, %v588, %v668
    %vm680 = vcmask 130048
    %v681 = vsel %vm680, %v679, %v672
    %vm682 = vcmask 195584
    %v683 = vsel %vm682, %v681, %v676
    %v684 = vadd.f32 %v683, %v557
    %v685 = vsel %vm563, %v684, -inf
    %686 = vmax.xlane.f32.xlu0 %v685
    %v687 = vpop.xlane.xlu0 %686
    %v688 = vsub.f32 %v684, %v687
    %v689 = vmul.f32 %v688, 1.442695
    %v690 = vpow.pop %v689
    %v692 = vsel %vm563, %v690, 0
    %694 = vmatpush.msra.mxu0 0.0
    %695 = vmatpush.msra.mxu0 0.0
    %696 = vmatpush.msra.mxu0 0.0
    %697 = vmatpush.msra.mxu0 0.0
    %698 = vmatpush.msra.mxu0 0.0
    %699 = vmatpush.msra.mxu0 0.0
    %700 = vmatpush.msra.mxu0 0.0
    %701 = vmatpush.msra.mxu0 0.0
    %702 = vmatpush.msra.mxu0 0.0
    %703 = vmatpush.msra.mxu0 0.0
    %704 = vmatpush.msra.mxu0 0.0
    %705 = vmatpush.msra.mxu0 0.0
    %706 = vmatpush.msra.mxu0 %v561
    %707 = vmatpush.msra.mxu0 %v560
    %708 = vmatpush.msra.mxu0 %v559
    %709 = vmatpush.msra.mxu0 %v558
    %710 = vmatmul.f32.gmra.mxu0 %v692
    %v711 = vpop.f32.mrf.mxu0
    %v712 = vadd.f32 0.0, %v711
    %713 = vdwg.mxu0
    %v714 = vrcp.pop %v712
    %v715 = vmul.f32 %v690, %v714
    %v717 = vsel %vm678, %v715, 0
    %719 = vmatpush.msra.mxu0 0.0
    %720 = vmatpush.msra.mxu0 0.0
    %721 = vmatpush.msra.mxu0 0.0
    %722 = vmatpush.msra.mxu0 0.0
    %723 = vmatpush.msra.mxu0 0.0
    %724 = vmatpush.msra.mxu0 0.0
    %725 = vmatpush.msra.mxu0 0.0
    %726 = vmatpush.msra.mxu0 0.0
    %727 = vmatpush.msra.mxu0 0.0
    %728 = vmatpush.msra.mxu0 0.0
    %729 = vmatpush.msra.mxu0 0.0
    %730 = vmatpush.msra.mxu0 0.0
    %731 = vmatpush.msra.mxu0 0.0
    %732 = vmatpush.msra.mxu0 0.0
    %733 = vmatpush.msra.mxu0 0.0
    %734 = vmatpush.msra.mxu0 %v372
    %735 = vmatmul.f32.gmra.mxu0 %v717
    %v736 = vpop.f32.mrf.mxu0
    %v737 = vadd.f32 0.0, %v736
    %738 = vdwg.mxu0
    %739 = vrot.lane.b32.xlu0 %v715, 120
    %v740 = vpop.permute.xlu0 %739
    %v741 = vsel %vm678, %v740, 0
    %743 = vmatpush.msra.mxu0 0.0
    %744 = vmatpush.msra.mxu0 0.0
    %745 = vmatpush.msra.mxu0 0.0
    %746 = vmatpush.msra.mxu0 0.0
    %747 = vmatpush.msra.mxu0 0.0
    %748 = vmatpush.msra.mxu0 0.0
    %749 = vmatpush.msra.mxu0 0.0
    %750 = vmatpush.msra.mxu0 0.0
    %751 = vmatpush.msra.mxu0 0.0
    %752 = vmatpush.msra.mxu0 0.0
    %753 = vmatpush.msra.mxu0 0.0
    %754 = vmatpush.msra.mxu0 0.0
    %755 = vmatpush.msra.mxu0 0.0
    %756 = vmatpush.msra.mxu0 0.0
    %757 = vmatpush.msra.mxu0 0.0
    %758 = vmatpush.msra.mxu0 %v372
    %759 = vmatmul.f32.gmra.mxu0 %v741
    %v760 = vpop.f32.mrf.mxu0
    %v761 = vadd.f32 0.0, %v760
    %762 = vdwg.mxu0
    %763 = vrot.lane.b32.xlu0 %v715, 112
    %v764 = vpop.permute.xlu0 %763
    %766 = vrot.lane.b32.xlu0 %v372, 96
    %v767 = vpop.permute.xlu0 %766
    %v769 = vsel %vm678, %v764, 0
    %771 = vmatpush.msra.mxu0 0.0
    %772 = vmatpush.msra.mxu0 0.0
    %773 = vmatpush.msra.mxu0 0.0
    %774 = vmatpush.msra.mxu0 0.0
    %775 = vmatpush.msra.mxu0 0.0
    %776 = vmatpush.msra.mxu0 0.0
    %777 = vmatpush.msra.mxu0 0.0
    %778 = vmatpush.msra.mxu0 0.0
    %779 = vmatpush.msra.mxu0 0.0
    %780 = vmatpush.msra.mxu0 0.0
    %781 = vmatpush.msra.mxu0 0.0
    %782 = vmatpush.msra.mxu0 0.0
    %783 = vmatpush.msra.mxu0 0.0
    %784 = vmatpush.msra.mxu0 0.0
    %785 = vmatpush.msra.mxu0 0.0
    %786 = vmatpush.msra.mxu0 %v767
    %787 = vmatmul.f32.gmra.mxu0 %v769
    %v788 = vpop.f32.mrf.mxu0
    %v789 = vadd.f32 0.0, %v788
    %790 = vdwg.mxu0
    %791 = vrot.lane.b32.xlu0 %v715, 104
    %v792 = vpop.permute.xlu0 %791
    %v793 = vsel %vm678, %v792, 0
    %795 = vmatpush.msra.mxu0 0.0
    %796 = vmatpush.msra.mxu0 0.0
    %797 = vmatpush.msra.mxu0 0.0
    %798 = vmatpush.msra.mxu0 0.0
    %799 = vmatpush.msra.mxu0 0.0
    %800 = vmatpush.msra.mxu0 0.0
    %801 = vmatpush.msra.mxu0 0.0
    %802 = vmatpush.msra.mxu0 0.0
    %803 = vmatpush.msra.mxu0 0.0
    %804 = vmatpush.msra.mxu0 0.0
    %805 = vmatpush.msra.mxu0 0.0
    %806 = vmatpush.msra.mxu0 0.0
    %807 = vmatpush.msra.mxu0 0.0
    %808 = vmatpush.msra.mxu0 0.0
    %809 = vmatpush.msra.mxu0 0.0
    %810 = vmatpush.msra.mxu0 %v767
    %811 = vmatmul.f32.gmra.mxu0 %v793
    %v812 = vpop.f32.mrf.mxu0
    %v813 = vadd.f32 0.0, %v812
    %814 = vdwg.mxu0
    %816 = vrot.lane.b32.xlu0 %v761, 32
    %v817 = vpop.permute.xlu0 %816
    %820 = vrot.lane.b32.xlu0 %v789, 64
    %v821 = vpop.permute.xlu0 %820
    %824 = vrot.lane.b32.xlu0 %v813, 96
    %v825 = vpop.permute.xlu0 %824
    %v827 = vsel %vm563, %v737, %v817
    %vm828 = vcmask 523264
    %v829 = vsel %vm828, %v827, %v821
    %vm830 = vcmask 785408
    %v831 = vsel %vm830, %v829, %v825
    %v832 = vpack.c.bf16 %v831, %v831
    %v833 = vld [vmem:[%s17] sm:$0xf]
    %v834 = vld [vmem:[%s17 + $0x4] sm:$0xf]
    %v835 = vld [vmem:[%s17 + $0x8] sm:$0xf]
    %v836 = vld [vmem:[%s17 + $0xc] sm:$0xf]
    %v837 = vld [vmem:[%s17 + $0x10] sm:$0xf]
    %v838 = vld [vmem:[%s17 + $0x14] sm:$0xf]
    %v839 = vld [vmem:[%s17 + $0x18] sm:$0xf]
    %v840 = vld [vmem:[%s17 + $0x1c] sm:$0xf]
    %v841 = vld [vmem:[%s17 + $0x20] sm:$0xf]
    %v842 = vld [vmem:[%s17 + $0x24] sm:$0xf]
    %v843 = vld [vmem:[%s17 + $0x28] sm:$0xf]
    %v844 = vld [vmem:[%s17 + $0x2c] sm:$0xf]
    %v845 = vld [vmem:[%s17 + $0x30] sm:$0xf]
    %v846 = vld [vmem:[%s17 + $0x34] sm:$0xf]
    %v847 = vld [vmem:[%s17 + $0x38] sm:$0xf]
    %v848 = vld [vmem:[%s17 + $0x3c] sm:$0xf]
    %v865 = vunpack.c.l.b16 %v833
    %v866 = vunpack.c.l.b16 %v834
    %v867 = vunpack.c.l.b16 %v835
    %v868 = vunpack.c.l.b16 %v836
    %v869 = vunpack.c.l.b16 %v837
    %v870 = vunpack.c.l.b16 %v838
    %v871 = vunpack.c.l.b16 %v839
    %v872 = vunpack.c.l.b16 %v840
    %v873 = vunpack.c.l.b16 %v841
    %v874 = vunpack.c.l.b16 %v842
    %v875 = vunpack.c.l.b16 %v843
    %v876 = vunpack.c.l.b16 %v844
    %v877 = vunpack.c.l.b16 %v845
    %v878 = vunpack.c.l.b16 %v846
    %v879 = vunpack.c.l.b16 %v847
    %v880 = vunpack.c.l.b16 %v848
    %v881 = vpack.c.b16 %v866, %v865
    %v882 = vpack.c.b16 %v868, %v867
    %v883 = vpack.c.b16 %v870, %v869
    %v884 = vpack.c.b16 %v872, %v871
    %v885 = vpack.c.b16 %v874, %v873
    %v886 = vpack.c.b16 %v876, %v875
    %v887 = vpack.c.b16 %v878, %v877
    %v888 = vpack.c.b16 %v880, %v879
    %897 = vmatpush.bf16.msra.mxu0 %v888
    %898 = vmatpush.bf16.msra.mxu0 %v887
    %899 = vmatpush.bf16.msra.mxu0 %v886
    %900 = vmatpush.bf16.msra.mxu0 %v885
    %901 = vmatpush.bf16.msra.mxu0 %v884
    %902 = vmatpush.bf16.msra.mxu0 %v883
    %903 = vmatpush.bf16.msra.mxu0 %v882
    %904 = vmatpush.bf16.msra.mxu0 %v881
    %905 = vmatmul.bf16.gmra.mxu0 %v832
    %v906 = vpop.f32.mrf.mxu0
    %v907 = vadd.f32 %v146, %v906
    %v908 = vpop.f32.mrf.mxu0
    %909 = vdwg.mxu0
    %910 = vst [vmem:[#allocation12] sm:$0xff] %v907
    %v911 = vld [vmem:[#allocation8] sm:$0x1]
    %v912 = vmul.f32 %v907, %v907
    %913 = vadd.xlane.f32.xlu0 %v912
    %v914 = vpop.xlane.xlu0 %913
    %v915 = vmul.f32 %v914, %v157
    %v916 = vadd.f32 %v915, 1e-05
    %v917 = vrsqrt.pop %v916
    %v918 = vmul.f32 %v917, %v916
    %v919 = vmul.f32 %v918, %v917
    %v920 = vmul.f32 0.5, %v919
    %v921 = vsub.f32 1.5, %v920
    %v922 = vmul.f32 %v917, %v921
    %vm923 = vweird.f32 %v916
    %vm924 = vweird.f32 %v917
    %vm925 = vmor %vm923, %vm924
    %v926 = vsel %vm925, %v917, %v922
    %v927 = vmul.f32 %v907, %v926
    %v929 = vperm.slane %v911, 0
    %v931 = vmul.f32 %v927, %v929
    %v932 = vpack.c.bf16 %v931, %v931
    %v933 = vld [vmem:[%s19] sm:$0xff]
    %v934 = vld [vmem:[%s19 + $0x8] sm:$0xff]
    %v935 = vld [vmem:[%s19 + $0x10] sm:$0xff]
    %v936 = vld [vmem:[%s19 + $0x18] sm:$0xff]
    %v937 = vld [vmem:[%s19 + $0x20] sm:$0xff]
    %v938 = vld [vmem:[%s19 + $0x28] sm:$0xff]
    %v939 = vld [vmem:[%s19 + $0x30] sm:$0xff]
    %v940 = vld [vmem:[%s19 + $0x38] sm:$0xff]
    %v941 = vld [vmem:[%s19 + $0x40] sm:$0xff]
    %v942 = vld [vmem:[%s19 + $0x48] sm:$0xff]
    %v943 = vld [vmem:[%s19 + $0x50] sm:$0xff]
    %v944 = vld [vmem:[%s19 + $0x58] sm:$0xff]
    %v945 = vld [vmem:[%s19 + $0x60] sm:$0xff]
    %v946 = vld [vmem:[%s19 + $0x68] sm:$0xff]
    %v947 = vld [vmem:[%s19 + $0x70] sm:$0xff]
    %v948 = vld [vmem:[%s19 + $0x78] sm:$0xff]
    %v965 = vunpack.c.l.b16 %v933
    %v966 = vunpack.c.h.b16 %v933
    %v967 = vunpack.c.l.b16 %v934
    %v968 = vunpack.c.h.b16 %v934
    %v969 = vunpack.c.l.b16 %v935
    %v970 = vunpack.c.h.b16 %v935
    %v971 = vunpack.c.l.b16 %v936
    %v972 = vunpack.c.h.b16 %v936
    %v973 = vunpack.c.l.b16 %v937
    %v974 = vunpack.c.h.b16 %v937
    %v975 = vunpack.c.l.b16 %v938
    %v976 = vunpack.c.h.b16 %v938
    %v977 = vunpack.c.l.b16 %v939
    %v978 = vunpack.c.h.b16 %v939
    %v979 = vunpack.c.l.b16 %v940
    %v980 = vunpack.c.h.b16 %v940
    %v981 = vunpack.c.l.b16 %v941
    %v982 = vunpack.c.h.b16 %v941
    %v983 = vunpack.c.l.b16 %v942
    %v984 = vunpack.c.h.b16 %v942
    %v985 = vunpack.c.l.b16 %v943
    %v986 = vunpack.c.h.b16 %v943
    %v987 = vunpack.c.l.b16 %v944
    %v988 = vunpack.c.h.b16 %v944
    %v989 = vunpack.c.l.b16 %v945
    %v990 = vunpack.c.h.b16 %v945
    %v991 = vunpack.c.l.b16 %v946
    %v992 = vunpack.c.h.b16 %v946
    %v993 = vunpack.c.l.b16 %v947
    %v994 = vunpack.c.h.b16 %v947
    %v995 = vunpack.c.l.b16 %v948
    %v996 = vunpack.c.h.b16 %v948
    %v997 = vpack.c.b16 %v967, %v965
    %v998 = vpack.c.b16 %v968, %v966
    %v999 = vpack.c.b16 %v971, %v969
    %v1000 = vpack.c.b16 %v972, %v970
    %v1001 = vpack.c.b16 %v975, %v973
    %v1002 = vpack.c.b16 %v976, %v974
    %v1003 = vpack.c.b16 %v979, %v977
    %v1004 = vpack.c.b16 %v980, %v978
    %v1005 = vpack.c.b16 %v983, %v981
    %v1006 = vpack.c.b16 %v984, %v982
    %v1007 = vpack.c.b16 %v987, %v985
    %v1008 = vpack.c.b16 %v988, %v986
    %v1009 = vpack.c.b16 %v991, %v989
    %v1010 = vpack.c.b16 %v992, %v990
    %v1011 = vpack.c.b16 %v995, %v993
    %v1012 = vpack.c.b16 %v996, %v994
    %1029 = vmatpush.bf16.msra.mxu0 %v1011
    %1030 = vmatpush.bf16.msra.mxu0 %v1009
    %1031 = vmatpush.bf16.msra.mxu0 %v1007
    %1032 = vmatpush.bf16.msra.mxu0 %v1005
    %1033 = vmatpush.bf16.msra.mxu0 %v1003
    %1034 = vmatpush.bf16.msra.mxu0 %v1001
    %1035 = vmatpush.bf16.msra.mxu0 %v999
    %1036 = vmatpush.bf16.msra.mxu0 %v997
    %1037 = vmatmul.bf16.gmra.mxu0 %v932
    %v1038 = vpop.f32.mrf.mxu0
    %v1039 = vadd.f32 0.0, %v1038
    %v1040 = vpop.f32.mrf.mxu0
    %1041 = vdwg.mxu0
    %1042 = vmatpush.bf16.msra.mxu0 %v1012
    %1043 = vmatpush.bf16.msra.mxu0 %v1010
    %1044 = vmatpush.bf16.msra.mxu0 %v1008
    %1045 = vmatpush.bf16.msra.mxu0 %v1006
    %1046 = vmatpush.bf16.msra.mxu0 %v1004
    %1047 = vmatpush.bf16.msra.mxu0 %v1002
    %1048 = vmatpush.bf16.msra.mxu0 %v1000
    %1049 = vmatpush.bf16.msra.mxu0 %v998
    %1050 = vmatmul.bf16.gmra.mxu0 %v932
    %v1051 = vpop.f32.mrf.mxu0
    %v1052 = vadd.f32 0.0, %v1051
    %v1053 = vpop.f32.mrf.mxu0
    %1054 = vdwg.mxu0
    %v1055 = vxor.u32 %v1039, 2147483648
    %v1056 = vmul.f32 %v1055, 1.442695
    %v1057 = vpow.pop %v1056
    %v1058 = vadd.f32 %v1057, 1.0
    %v1059 = vrcp.pop %v1058
    %v1060 = vmul.f32 %v1058, %v1059
    %v1061 = vsub.f32 1.0, %v1060
    %v1062 = vmul.f32 %v1059, %v1061
    %v1063 = vadd.f32 %v1059, %v1062
    %vm1064 = vweird.f32 %v1058
    %vm1065 = vweird.f32 %v1059
    %vm1066 = vmor %vm1064, %vm1065
    %v1067 = vsel %vm1066, %v1059, %v1063
    %v1068 = vand.u32 2147483647, %v1058
    %vm1069 = vcmp.eq.f32.partialorder %v1068, 8.507059e+37
    %v1070 = vand.u32 %v1058, 2147483648
    %v1071 = vor.u32 1.1754944e-38, %v1070
    %v1072 = vsel %vm1069, %v1071, %v1067
    %v1073 = vmul.f32 1.0, %v1072
    %v1074 = vmul.f32 %v1039, %v1073
    %v1075 = vmul.f32 %v1074, %v1052
    %v1076 = vpack.c.bf16 %v1075, %v1075
    %v1077 = vld [vmem:[#allocation10] sm:$0xf]
    %v1078 = vld [vmem:[#allocation10 + $0x4] sm:$0xf]
    %v1079 = vld [vmem:[#allocation10 + $0x8] sm:$0xf]
    %v1080 = vld [vmem:[#allocation10 + $0xc] sm:$0xf]
    %v1081 = vld [vmem:[#allocation10 + $0x10] sm:$0xf]
    %v1082 = vld [vmem:[#allocation10 + $0x14] sm:$0xf]
    %v1083 = vld [vmem:[#allocation10 + $0x18] sm:$0xf]
    %v1084 = vld [vmem:[#allocation10 + $0x1c] sm:$0xf]
    %v1085 = vld [vmem:[#allocation10 + $0x20] sm:$0xf]
    %v1086 = vld [vmem:[#allocation10 + $0x24] sm:$0xf]
    %v1087 = vld [vmem:[#allocation10 + $0x28] sm:$0xf]
    %v1088 = vld [vmem:[#allocation10 + $0x2c] sm:$0xf]
    %v1089 = vld [vmem:[#allocation10 + $0x30] sm:$0xf]
    %v1090 = vld [vmem:[#allocation10 + $0x34] sm:$0xf]
    %v1091 = vld [vmem:[#allocation10 + $0x38] sm:$0xf]
    %v1092 = vld [vmem:[#allocation10 + $0x3c] sm:$0xf]
    %v1109 = vunpack.c.l.b16 %v1077
    %v1110 = vunpack.c.l.b16 %v1078
    %v1111 = vunpack.c.l.b16 %v1079
    %v1112 = vunpack.c.l.b16 %v1080
    %v1113 = vunpack.c.l.b16 %v1081
    %v1114 = vunpack.c.l.b16 %v1082
    %v1115 = vunpack.c.l.b16 %v1083
    %v1116 = vunpack.c.l.b16 %v1084
    %v1117 = vunpack.c.l.b16 %v1085
    %v1118 = vunpack.c.l.b16 %v1086
    %v1119 = vunpack.c.l.b16 %v1087
    %v1120 = vunpack.c.l.b16 %v1088
    %v1121 = vunpack.c.l.b16 %v1089
    %v1122 = vunpack.c.l.b16 %v1090
    %v1123 = vunpack.c.l.b16 %v1091
    %v1124 = vunpack.c.l.b16 %v1092
    %v1125 = vpack.c.b16 %v1110, %v1109
    %v1126 = vpack.c.b16 %v1112, %v1111
    %v1127 = vpack.c.b16 %v1114, %v1113
    %v1128 = vpack.c.b16 %v1116, %v1115
    %v1129 = vpack.c.b16 %v1118, %v1117
    %v1130 = vpack.c.b16 %v1120, %v1119
    %v1131 = vpack.c.b16 %v1122, %v1121
    %v1132 = vpack.c.b16 %v1124, %v1123
    %1141 = vmatpush.bf16.msra.mxu0 %v1132
    %1142 = vmatpush.bf16.msra.mxu0 %v1131
    %1143 = vmatpush.bf16.msra.mxu0 %v1130
    %1144 = vmatpush.bf16.msra.mxu0 %v1129
    %1145 = vmatpush.bf16.msra.mxu0 %v1128
    %1146 = vmatpush.bf16.msra.mxu0 %v1127
    %1147 = vmatpush.bf16.msra.mxu0 %v1126
    %1148 = vmatpush.bf16.msra.mxu0 %v1125
    %1149 = vmatmul.bf16.gmra.mxu0 %v1076
    %v1150 = vpop.f32.mrf.mxu0
    %v1151 = vadd.f32 0.0, %v1150
    %v1152 = vpop.f32.mrf.mxu0
    %1153 = vdwg.mxu0
    %1154 = vst [vmem:[#allocation11] sm:$0xff] %v1151
    // Predicated region
    $region106: #{chameleon_decoder_layer.1} parent=1 // pred_check
      _
    $region107: #{chameleon_decoder_layer.1} parent=1 // pred_check_branch
      %1156 = sbr.rel (0) target = $region109
    $region108: #{chameleon_decoder_layer.1} parent=1 // pred_region
      %1158 = vsyncadd [#allocation4], 0
      %s1160 = sshll.u32 [#allocation11], 4
      %s1161 = int_to_ptr.vmem [resolvable:$true] %s1160
      %s1162 = sshll.u32 %s21, 4
      %s1163 = int_to_ptr.hbm [resolvable:$true] %s1162
      %1165 = dma.vmem_to_hbm [thread:$0]  %s1161, 128, %s1163, [#allocation4]
    $region109: #{chameleon_decoder_layer.1} parent=1 // pred_fallthru
      _
    // Predicated region
    $region110: #{chameleon_decoder_layer.1} parent=1 // pred_check
      _
    $region111: #{chameleon_decoder_layer.1} parent=1 // pred_check_branch
      %1167 = sbr.rel (0) target = $region113
    $region112: #{chameleon_decoder_layer.1} parent=1 // pred_region
      %1169 = vsyncadd [#allocation13], 0
      %s1171 = sshll.u32 [#allocation12], 4
      %s1172 = int_to_ptr.vmem [resolvable:$true] %s1171
      %s1173 = sshll.u32 %s22, 4
      %s1174 = int_to_ptr.hbm [resolvable:$true] %s1173
      %1176 = dma.vmem_to_hbm [thread:$0]  %s1172, 128, %s1174, [#allocation13]
    $region113: #{chameleon_decoder_layer.1} parent=1 // pred_fallthru
      _
    // Predicated region
    $region114: #{chameleon_decoder_layer.1} parent=1 // pred_check
      _
    $region115: #{chameleon_decoder_layer.1} parent=1 // pred_check_branch
      %1178 = sbr.rel (0) target = $region117
    $region116: #{chameleon_decoder_layer.1} parent=1 // pred_region
      %1180 = dma.done [#allocation4], 128
    $region117: #{chameleon_decoder_layer.1} parent=1 // pred_fallthru
      _
    // Predicated region
    $region118: #{chameleon_decoder_layer.1} parent=1 // pred_check
      _
    $region119: #{chameleon_decoder_layer.1} parent=1 // pred_check_branch
      %1182 = sbr.rel (0) target = $region121
    $region120: #{chameleon_decoder_layer.1} parent=1 // pred_region
      %1184 = dma.done [#allocation13], 128
    $region121: #{chameleon_decoder_layer.1} parent=1 // pred_fallthru
      _
    %1185 = vsyncpa [#allocation3], 1
    %1186 = vsyncpa [#allocation6], 1
    %1187 = vsyncpa [#allocation9], 1
    %1188 = vsyncpa [#allocation4], 1
    %1189 = vsyncpa [#allocation13], 1

</llo_original>
